<compile_context>
chip_gen: v7x
topology: tpu7x:2x2x1
jax: 0.10.0
libtpu: 0.0.40
codegen_flags: <defaults>
</compile_context>

<pallas_src>
import functools

import jax
import jax.numpy as jnp
from jax.experimental import pallas as pl
from jax.experimental.pallas import tpu as pltpu


_LANE = 128
_SUBLANE = 8


def _round_up(n, m):
    return ((n + m - 1) // m) * m


def _leaky_relu(x, slope=0.2):
    return jnp.where(x > 0, x, slope * x)


@functools.lru_cache(maxsize=1)
def _vmem_limit_bytes():
    """Per-generation VMEM limit with headroom (v7x has 64 MiB, v5e/v6e 128).

    Leave ~1/8 of physical VMEM for the x/out double buffers, f32
    intermediates and Mosaic internal scratch.
    """
    try:
        cap = pltpu.get_tpu_info().vmem_capacity_bytes
    except Exception:
        cap = 64 * 1024 * 1024  # conservative fallback (fits every generation)
    return int(cap - cap // 8)


def _pick_batch_tile(batch):
    """Batch tile: amortize the ~0.35us per-grid-step overhead.

    Prefer 256-multiples (v6e/v7x MXU is 256-wide) but keep >=2 grid steps so
    both v7x TensorCores get work under the 'parallel' batch axis; 128 is the
    floor (MXU M tile); tiny batches round to the 8-sublane minimum.
    """
    if batch < _LANE:
        return _round_up(batch, _SUBLANE)
    for tb in (512, 256):
        if batch >= 2 * tb:
            return tb
    return _LANE


# ---------------------------------------------------------------------------
# Padded parameter container (padding/casting done ONCE, outside the forward).
# ---------------------------------------------------------------------------
@jax.tree_util.register_pytree_node_class
class GeneratorParams:
    """Lane-padded, pre-cast weights/biases; built once, reused every call."""

    def __init__(self, ws, bs, out_size):
        self.ws = tuple(ws)          # 4 weights, [K_pad, N_pad], compute dtype
        self.bs = tuple(bs)          # 4 biases,  [1, N_pad], f32
        self.out_size = out_size     # original (unpadded) output width, e.g. 784

    def tree_flatten(self):
        return ((self.ws, self.bs), self.out_size)

    @classmethod
    def tree_unflatten(cls, out_size, children):
        ws, bs = children
        return cls(ws, bs, out_size)


def prepare_generator_params(params, compute_dtype=jnp.float32):
    """Pad every feature dim to a multiple of 128 lanes and cast weights.

    Hoisted out of the per-call forward so the full weight set is not
    re-read/re-written in HBM on every call.  compute_dtype=jnp.bfloat16 is
    recommended on all generations (bf16 MXU rate + half the weight DMA);
    accumulation and the leaky-ReLU/tanh epilogue stay f32 either way.
    """
    (w1, b1), (w2, b2), (w3, b3), (w4, b4) = params
    dims = [w1.shape[0], w1.shape[1], w2.shape[1], w3.shape[1], w4.shape[1]]
    pdims = [_round_up(d, _LANE) for d in dims]   # 784 -> 896, small dims -> 128

    def pad2(a, rows, cols, dtype):
        a = jnp.asarray(a, dtype)
        return jnp.pad(a, ((0, rows - a.shape[0]), (0, cols - a.shape[1])))

    ws = [pad2(w, pdims[i], pdims[i + 1], compute_dtype)
          for i, w in enumerate((w1, w2, w3, w4))]
    bs = [pad2(b, 1, pdims[i + 1], jnp.float32)
          for i, b in enumerate((b1, b2, b3, b4))]
    return GeneratorParams(ws, bs, dims[4])


# ---------------------------------------------------------------------------
# Kernel
# ---------------------------------------------------------------------------
def generator_kernel(x_ref,
                     w1_ref, b1_ref,
                     w2_ref, b2_ref,
                     w3_ref, b3_ref,
                     w4_ref, b4_ref,
                     o_ref):
    """Fused 4-layer MLP; weights stay resident in VMEM across the batch grid.

    Dots accumulate in f32; leaky-ReLU / tanh epilogues run in f32 (correct on
    v5e's f32-only VPU/EUP).  Activations are cast back to the weight dtype
    before each dot so the bf16 path feeds the MXU bf16.
    """
    h = jnp.dot(x_ref[...], w1_ref[...], preferred_element_type=jnp.float32)
    h = _leaky_relu(h + b1_ref[...])

    h = jnp.dot(h.astype(w2_ref.dtype), w2_ref[...],
                preferred_element_type=jnp.float32)
    h = _leaky_relu(h + b2_ref[...])

    h = jnp.dot(h.astype(w3_ref.dtype), w3_ref[...],
                preferred_element_type=jnp.float32)
    h = _leaky_relu(h + b3_ref[...])

    h = jnp.dot(h.astype(w4_ref.dtype), w4_ref[...],
                preferred_element_type=jnp.float32)
    o_ref[...] = jnp.tanh(h + b4_ref[...]).astype(o_ref.dtype)


# ---------------------------------------------------------------------------
# Forward
# ---------------------------------------------------------------------------
@functools.partial(jax.jit, static_argnames=("unpad", "single_buffer_weights"))
def generator_forward(x, gp, unpad=True, single_buffer_weights=True):
    """Forward pass on pre-padded params.  Only x is padded per call (cheap)."""
    ws, bs = gp.ws, gp.bs
    compute_dtype = ws[0].dtype
    batch, in_size = x.shape
    pdims = [ws[0].shape[0]] + [w.shape[1] for w in ws]

    tb = _pick_batch_tile(batch)
    batch_p = _round_up(batch, tb)
    grid = (batch_p // tb,)

    x_p = jnp.pad(x.astype(compute_dtype),
                  ((0, batch_p - batch), (0, pdims[0] - in_size)))

    # Constant-index_map weights/biases are never re-fetched across the batch
    # grid, so double-buffering them is pure VMEM waste (matters on v7x).
    weight_mode = pl.Buffered(1) if single_buffer_weights else None

    # TODO(synk): add a K/N-tiled path for w3/w4 (extra 'arbitrary' grid axis)
    # when the resident weight set exceeds the VMEM budget — only matters for
    # very large H on v7x (roughly H >= 768 f32 / H >= 1500 bf16); use the
    # bf16 prepare path first.
    in_specs = [pl.BlockSpec((tb, pdims[0]), lambda i: (i, 0))]
    for k in range(4):
        in_specs.append(pl.BlockSpec((pdims[k], pdims[k + 1]),
                                     lambda i: (0, 0),
                                     pipeline_mode=weight_mode))
        in_specs.append(pl.BlockSpec((1, pdims[k + 1]),
                                     lambda i: (0, 0),
                                     pipeline_mode=weight_mode))
    out_spec = pl.BlockSpec((tb, pdims[4]), lambda i: (i, 0))

    out_p = pl.pallas_call(
        generator_kernel,
        out_shape=jax.ShapeDtypeStruct((batch_p, pdims[4]), compute_dtype),
        grid=grid,
        in_specs=in_specs,
        out_specs=out_spec,
        compiler_params=pltpu.CompilerParams(
            dimension_semantics=("parallel",),      # dual-TC sharding on v7x
            vmem_limit_bytes=_vmem_limit_bytes(),   # per-generation, w/ headroom
        ),
    )(x_p, ws[0], bs[0], ws[1], bs[1], ws[2], bs[2], ws[3], bs[3])

    if unpad:
        return out_p[:batch, :gp.out_size]
    return out_p  # padded, lane-dense [batch_p, 896] slab (no extra copy pass)


def _run_forward(x, gp):
    """Run forward; fall back to default (double-buffered) weights if this
    jax build rejects pl.Buffered(1) on the resident-weight BlockSpecs."""
    try:
        return jax.block_until_ready(generator_forward(x, gp))
    except Exception:
        return jax.block_until_ready(
            generator_forward(x, gp, single_buffer_weights=False))


# ---------------------------------------------------------------------------
# Init / reference
# ---------------------------------------------------------------------------
def init_generator_params(key, input_size, hidden_dim):
    """Deterministic init mimicking nn.Linear's uniform(-1/sqrt(fan_in), +)."""
    output_size = 28 * 28
    dims = [input_size, hidden_dim, 2 * hidden_dim, 4 * hidden_dim, output_size]
    params = []
    for i in range(4):
        fan_in, fan_out = dims[i], dims[i + 1]
        key, kw, kb = jax.random.split(key, 3)
        bound = 1.0 / jnp.sqrt(fan_in)
        w = jax.random.uniform(kw, (fan_in, fan_out), jnp.float32, -bound, bound)
        b = jax.random.uniform(kb, (1, fan_out), jnp.float32, -bound, bound)
        params.append((w, b))
    return params


def reference_forward(x, params):
    """Pure-JAX reference for correctness checking."""
    h = x
    for i, (w, b) in enumerate(params):
        h = h @ w + b
        if i < 3:
            h = jnp.where(h > 0, h, 0.2 * h)
        else:
            h = jnp.tanh(h)
    return h


if __name__ == "__main__":
    batch = 2
    input_size = 64     # latent z dimension
    hidden_dim = 32

    key = jax.random.PRNGKey(0)
    key, kx = jax.random.split(key)
    x = jax.random.normal(kx, (batch, input_size), jnp.float32)

    params = init_generator_params(key, input_size, hidden_dim)
    ref = reference_forward(x, params)

    # f32 path (weights padded/cast once, outside the per-call forward).
    gp_f32 = prepare_generator_params(params, compute_dtype=jnp.float32)
    out = _run_forward(x, gp_f32)
    assert out.shape == (batch, 28 * 28), out.shape
    assert jnp.allclose(out, ref, atol=1e-4, rtol=1e-4), \
        float(jnp.max(jnp.abs(out - ref)))

    # bf16 weights/activations path (recommended on v5e/v6e/v7x; f32 accum).
    gp_bf16 = prepare_generator_params(params, compute_dtype=jnp.bfloat16)
    out_bf16 = _run_forward(x, gp_bf16)
    assert out_bf16.shape == (batch, 28 * 28), out_bf16.shape
    assert float(jnp.max(jnp.abs(out_bf16.astype(jnp.float32) - ref))) < 5e-2, \
        float(jnp.max(jnp.abs(out_bf16.astype(jnp.float32) - ref)))

    print("KERNEL_OK")
</pallas_src>

<mosaic_0001>
module attributes {stable_mosaic.version = 11 : i64} {
  func.func @generator_kernel(%arg0: i32, %arg1: memref<8x128xf32, #tpu.memory_space<vmem>>, %arg2: memref<128x128xf32, #tpu.memory_space<vmem>>, %arg3: memref<1x128xf32, #tpu.memory_space<vmem>>, %arg4: memref<128x128xf32, #tpu.memory_space<vmem>>, %arg5: memref<1x128xf32, #tpu.memory_space<vmem>>, %arg6: memref<128x128xf32, #tpu.memory_space<vmem>>, %arg7: memref<1x128xf32, #tpu.memory_space<vmem>>, %arg8: memref<128x896xf32, #tpu.memory_space<vmem>>, %arg9: memref<1x896xf32, #tpu.memory_space<vmem>>, %arg10: memref<8x896xf32, #tpu.memory_space<vmem>>) attributes {dimension_semantics = [#tpu.dimension_semantics<parallel>], iteration_bounds = array<i64: 1>, scalar_prefetch = 0 : i64, scratch_operands = 0 : i64, tpu.core_type = #tpu.core_type<tc>, window_params = [{transform_indices = @transform_0, window_bounds = array<i64: 8, 128>}, {pipeline_mode = #tpu.pipeline_mode<synchronous>, transform_indices = @transform_1, window_bounds = array<i64: 128, 128>}, {pipeline_mode = #tpu.pipeline_mode<synchronous>, transform_indices = @transform_2, window_bounds = array<i64: 1, 128>}, {pipeline_mode = #tpu.pipeline_mode<synchronous>, transform_indices = @transform_3, window_bounds = array<i64: 128, 128>}, {pipeline_mode = #tpu.pipeline_mode<synchronous>, transform_indices = @transform_4, window_bounds = array<i64: 1, 128>}, {pipeline_mode = #tpu.pipeline_mode<synchronous>, transform_indices = @transform_5, window_bounds = array<i64: 128, 128>}, {pipeline_mode = #tpu.pipeline_mode<synchronous>, transform_indices = @transform_6, window_bounds = array<i64: 1, 128>}, {pipeline_mode = #tpu.pipeline_mode<synchronous>, transform_indices = @transform_7, window_bounds = array<i64: 128, 896>}, {pipeline_mode = #tpu.pipeline_mode<synchronous>, transform_indices = @transform_8, window_bounds = array<i64: 1, 896>}, {transform_indices = @transform_9, window_bounds = array<i64: 8, 896>}]} {
    %c0 = arith.constant 0 : index
    %c0_0 = arith.constant 0 : index
    %0 = vector.load %arg1[%c0, %c0_0] : memref<8x128xf32, #tpu.memory_space<vmem>>, vector<8x128xf32>
    %c0_1 = arith.constant 0 : index
    %c0_2 = arith.constant 0 : index
    %1 = vector.load %arg2[%c0_1, %c0_2] : memref<128x128xf32, #tpu.memory_space<vmem>>, vector<128x128xf32>
    %cst = arith.constant dense<0.000000e+00> : vector<8x128xf32>
    %2 = tpu.matmul %0, %1, %cst {dimension_numbers = #tpu.dot_dimension_numbers<[1], [0], [0], [1], [0, 0, 1, 1], [], []>} : vector<8x128xf32>, vector<128x128xf32>, vector<8x128xf32> -> vector<8x128xf32>
    %c0_3 = arith.constant 0 : index
    %c0_4 = arith.constant 0 : index
    %3 = vector.load %arg3[%c0_3, %c0_4] : memref<1x128xf32, #tpu.memory_space<vmem>>, vector<1x128xf32>
    %4 = vector.broadcast %3 : vector<1x128xf32> to vector<8x128xf32>
    %5 = arith.addf %2, %4 : vector<8x128xf32>
    %cst_5 = arith.constant 0.000000e+00 : f32
    %6 = vector.broadcast %cst_5 : f32 to vector<8x128xf32>
    %7 = arith.cmpf ogt, %5, %6 : vector<8x128xf32>
    %cst_6 = arith.constant 2.000000e-01 : f32
    %8 = vector.broadcast %cst_6 : f32 to vector<8x128xf32>
    %9 = arith.mulf %8, %5 : vector<8x128xf32>
    %10 = arith.select %7, %5, %9 : vector<8x128xi1>, vector<8x128xf32>
    %c0_7 = arith.constant 0 : index
    %c0_8 = arith.constant 0 : index
    %11 = vector.load %arg4[%c0_7, %c0_8] : memref<128x128xf32, #tpu.memory_space<vmem>>, vector<128x128xf32>
    %cst_9 = arith.constant dense<0.000000e+00> : vector<8x128xf32>
    %12 = tpu.matmul %10, %11, %cst_9 {dimension_numbers = #tpu.dot_dimension_numbers<[1], [0], [0], [1], [0, 0, 1, 1], [], []>} : vector<8x128xf32>, vector<128x128xf32>, vector<8x128xf32> -> vector<8x128xf32>
    %c0_10 = arith.constant 0 : index
    %c0_11 = arith.constant 0 : index
    %13 = vector.load %arg5[%c0_10, %c0_11] : memref<1x128xf32, #tpu.memory_space<vmem>>, vector<1x128xf32>
    %14 = vector.broadcast %13 : vector<1x128xf32> to vector<8x128xf32>
    %15 = arith.addf %12, %14 : vector<8x128xf32>
    %cst_12 = arith.constant 0.000000e+00 : f32
    %16 = vector.broadcast %cst_12 : f32 to vector<8x128xf32>
    %17 = arith.cmpf ogt, %15, %16 : vector<8x128xf32>
    %cst_13 = arith.constant 2.000000e-01 : f32
    %18 = vector.broadcast %cst_13 : f32 to vector<8x128xf32>
    %19 = arith.mulf %18, %15 : vector<8x128xf32>
    %20 = arith.select %17, %15, %19 : vector<8x128xi1>, vector<8x128xf32>
    %c0_14 = arith.constant 0 : index
    %c0_15 = arith.constant 0 : index
    %21 = vector.load %arg6[%c0_14, %c0_15] : memref<128x128xf32, #tpu.memory_space<vmem>>, vector<128x128xf32>
    %cst_16 = arith.constant dense<0.000000e+00> : vector<8x128xf32>
    %22 = tpu.matmul %20, %21, %cst_16 {dimension_numbers = #tpu.dot_dimension_numbers<[1], [0], [0], [1], [0, 0, 1, 1], [], []>} : vector<8x128xf32>, vector<128x128xf32>, vector<8x128xf32> -> vector<8x128xf32>
    %c0_17 = arith.constant 0 : index
    %c0_18 = arith.constant 0 : index
    %23 = vector.load %arg7[%c0_17, %c0_18] : memref<1x128xf32, #tpu.memory_space<vmem>>, vector<1x128xf32>
    %24 = vector.broadcast %23 : vector<1x128xf32> to vector<8x128xf32>
    %25 = arith.addf %22, %24 : vector<8x128xf32>
    %cst_19 = arith.constant 0.000000e+00 : f32
    %26 = vector.broadcast %cst_19 : f32 to vector<8x128xf32>
    %27 = arith.cmpf ogt, %25, %26 : vector<8x128xf32>
    %cst_20 = arith.constant 2.000000e-01 : f32
    %28 = vector.broadcast %cst_20 : f32 to vector<8x128xf32>
    %29 = arith.mulf %28, %25 : vector<8x128xf32>
    %30 = arith.select %27, %25, %29 : vector<8x128xi1>, vector<8x128xf32>
    %c0_21 = arith.constant 0 : index
    %c0_22 = arith.constant 0 : index
    %31 = vector.load %arg8[%c0_21, %c0_22] : memref<128x896xf32, #tpu.memory_space<vmem>>, vector<128x896xf32>
    %cst_23 = arith.constant dense<0.000000e+00> : vector<8x896xf32>
    %32 = tpu.matmul %30, %31, %cst_23 {dimension_numbers = #tpu.dot_dimension_numbers<[1], [0], [0], [1], [0, 0, 1, 1], [], []>} : vector<8x128xf32>, vector<128x896xf32>, vector<8x896xf32> -> vector<8x896xf32>
    %c0_24 = arith.constant 0 : index
    %c0_25 = arith.constant 0 : index
    %33 = vector.load %arg9[%c0_24, %c0_25] : memref<1x896xf32, #tpu.memory_space<vmem>>, vector<1x896xf32>
    %34 = vector.broadcast %33 : vector<1x896xf32> to vector<8x896xf32>
    %35 = arith.addf %32, %34 : vector<8x896xf32>
    %36 = math.tanh %35 : vector<8x896xf32>
    %c0_26 = arith.constant 0 : index
    %c0_27 = arith.constant 0 : index
    %37 = vector.load %arg10[%c0_26, %c0_27] : memref<8x896xf32, #tpu.memory_space<vmem>>, vector<8x896xf32>
    tpu.vector_store %arg10[%c0_26, %c0_27], %36 {strides = array<i32>} : memref<8x896xf32, #tpu.memory_space<vmem>>, vector<8x896xf32>,
    return
  }
  func.func @transform_0(%arg0: i32) -> (i32, i32) {
    %c0_i32 = arith.constant 0 : i32
    %c0_i32_0 = arith.constant 0 : i32
    return %arg0, %c0_i32 : i32, i32
  }
  func.func @transform_1(%arg0: i32) -> (i32, i32) {
    %c0_i32 = arith.constant 0 : i32
    %c0_i32_0 = arith.constant 0 : i32
    %c0_i32_1 = arith.constant 0 : i32
    return %c0_i32, %c0_i32_0 : i32, i32
  }
  func.func @transform_2(%arg0: i32) -> (i32, i32) {
    %c0_i32 = arith.constant 0 : i32
    %c0_i32_0 = arith.constant 0 : i32
    %c0_i32_1 = arith.constant 0 : i32
    return %c0_i32, %c0_i32_0 : i32, i32
  }
  func.func @transform_3(%arg0: i32) -> (i32, i32) {
    %c0_i32 = arith.constant 0 : i32
    %c0_i32_0 = arith.constant 0 : i32
    %c0_i32_1 = arith.constant 0 : i32
    return %c0_i32, %c0_i32_0 : i32, i32
  }
  func.func @transform_4(%arg0: i32) -> (i32, i32) {
    %c0_i32 = arith.constant 0 : i32
    %c0_i32_0 = arith.constant 0 : i32
    %c0_i32_1 = arith.constant 0 : i32
    return %c0_i32, %c0_i32_0 : i32, i32
  }
  func.func @transform_5(%arg0: i32) -> (i32, i32) {
    %c0_i32 = arith.constant 0 : i32
    %c0_i32_0 = arith.constant 0 : i32
    %c0_i32_1 = arith.constant 0 : i32
    return %c0_i32, %c0_i32_0 : i32, i32
  }
  func.func @transform_6(%arg0: i32) -> (i32, i32) {
    %c0_i32 = arith.constant 0 : i32
    %c0_i32_0 = arith.constant 0 : i32
    %c0_i32_1 = arith.constant 0 : i32
    return %c0_i32, %c0_i32_0 : i32, i32
  }
  func.func @transform_7(%arg0: i32) -> (i32, i32) {
    %c0_i32 = arith.constant 0 : i32
    %c0_i32_0 = arith.constant 0 : i32
    %c0_i32_1 = arith.constant 0 : i32
    return %c0_i32, %c0_i32_0 : i32, i32
  }
  func.func @transform_8(%arg0: i32) -> (i32, i32) {
    %c0_i32 = arith.constant 0 : i32
    %c0_i32_0 = arith.constant 0 : i32
    %c0_i32_1 = arith.constant 0 : i32
    return %c0_i32, %c0_i32_0 : i32, i32
  }
  func.func @transform_9(%arg0: i32) -> (i32, i32) {
    %c0_i32 = arith.constant 0 : i32
    %c0_i32_0 = arith.constant 0 : i32
    return %arg0, %c0_i32 : i32, i32
  }
}

module attributes {stable_mosaic.version = 11 : i64} {
  func.func @generator_kernel(%arg0: i32, %arg1: memref<8x128xf32, #tpu.memory_space<vmem>>, %arg2: memref<128x128xf32, #tpu.memory_space<vmem>>, %arg3: memref<1x128xf32, #tpu.memory_space<vmem>>, %arg4: memref<128x128xf32, #tpu.memory_space<vmem>>, %arg5: memref<1x128xf32, #tpu.memory_space<vmem>>, %arg6: memref<128x128xf32, #tpu.memory_space<vmem>>, %arg7: memref<1x128xf32, #tpu.memory_space<vmem>>, %arg8: memref<128x896xf32, #tpu.memory_space<vmem>>, %arg9: memref<1x896xf32, #tpu.memory_space<vmem>>, %arg10: memref<8x896xf32, #tpu.memory_space<vmem>>) attributes {dimension_semantics = [#tpu.dimension_semantics<parallel>], iteration_bounds = array<i64: 1>, scalar_prefetch = 0 : i64, scratch_operands = 0 : i64, tpu.core_type = #tpu.core_type<tc>, window_params = [{transform_indices = @transform_0, window_bounds = array<i64: 8, 128>}, {pipeline_mode = #tpu.pipeline_mode<synchronous>, transform_indices = @transform_1, window_bounds = array<i64: 128, 128>}, {pipeline_mode = #tpu.pipeline_mode<synchronous>, transform_indices = @transform_2, window_bounds = array<i64: 1, 128>}, {pipeline_mode = #tpu.pipeline_mode<synchronous>, transform_indices = @transform_3, window_bounds = array<i64: 128, 128>}, {pipeline_mode = #tpu.pipeline_mode<synchronous>, transform_indices = @transform_4, window_bounds = array<i64: 1, 128>}, {pipeline_mode = #tpu.pipeline_mode<synchronous>, transform_indices = @transform_5, window_bounds = array<i64: 128, 128>}, {pipeline_mode = #tpu.pipeline_mode<synchronous>, transform_indices = @transform_6, window_bounds = array<i64: 1, 128>}, {pipeline_mode = #tpu.pipeline_mode<synchronous>, transform_indices = @transform_7, window_bounds = array<i64: 128, 896>}, {pipeline_mode = #tpu.pipeline_mode<synchronous>, transform_indices = @transform_8, window_bounds = array<i64: 1, 896>}, {transform_indices = @transform_9, window_bounds = array<i64: 8, 896>}]} {
    %c0 = arith.constant 0 : index
    %c0_0 = arith.constant 0 : index
    %0 = vector.load %arg1[%c0, %c0_0] : memref<8x128xf32, #tpu.memory_space<vmem>>, vector<8x128xf32>
    %c0_1 = arith.constant 0 : index
    %c0_2 = arith.constant 0 : index
    %1 = vector.load %arg2[%c0_1, %c0_2] : memref<128x128xf32, #tpu.memory_space<vmem>>, vector<128x128xf32>
    %cst = arith.constant dense<0.000000e+00> : vector<8x128xf32>
    %2 = tpu.matmul %0, %1, %cst {dimension_numbers = #tpu.dot_dimension_numbers<[1], [0], [0], [1], [0, 0, 1, 1], [], []>} : vector<8x128xf32>, vector<128x128xf32>, vector<8x128xf32> -> vector<8x128xf32>
    %c0_3 = arith.constant 0 : index
    %c0_4 = arith.constant 0 : index
    %3 = vector.load %arg3[%c0_3, %c0_4] : memref<1x128xf32, #tpu.memory_space<vmem>>, vector<1x128xf32>
    %4 = vector.broadcast %3 : vector<1x128xf32> to vector<8x128xf32>
    %5 = arith.addf %2, %4 : vector<8x128xf32>
    %cst_5 = arith.constant 0.000000e+00 : f32
    %6 = vector.broadcast %cst_5 : f32 to vector<8x128xf32>
    %7 = arith.cmpf ogt, %5, %6 : vector<8x128xf32>
    %cst_6 = arith.constant 2.000000e-01 : f32
    %8 = vector.broadcast %cst_6 : f32 to vector<8x128xf32>
    %9 = arith.mulf %8, %5 : vector<8x128xf32>
    %10 = arith.select %7, %5, %9 : vector<8x128xi1>, vector<8x128xf32>
    %c0_7 = arith.constant 0 : index
    %c0_8 = arith.constant 0 : index
    %11 = vector.load %arg4[%c0_7, %c0_8] : memref<128x128xf32, #tpu.memory_space<vmem>>, vector<128x128xf32>
    %cst_9 = arith.constant dense<0.000000e+00> : vector<8x128xf32>
    %12 = tpu.matmul %10, %11, %cst_9 {dimension_numbers = #tpu.dot_dimension_numbers<[1], [0], [0], [1], [0, 0, 1, 1], [], []>} : vector<8x128xf32>, vector<128x128xf32>, vector<8x128xf32> -> vector<8x128xf32>
    %c0_10 = arith.constant 0 : index
    %c0_11 = arith.constant 0 : index
    %13 = vector.load %arg5[%c0_10, %c0_11] : memref<1x128xf32, #tpu.memory_space<vmem>>, vector<1x128xf32>
    %14 = vector.broadcast %13 : vector<1x128xf32> to vector<8x128xf32>
    %15 = arith.addf %12, %14 : vector<8x128xf32>
    %cst_12 = arith.constant 0.000000e+00 : f32
    %16 = vector.broadcast %cst_12 : f32 to vector<8x128xf32>
    %17 = arith.cmpf ogt, %15, %16 : vector<8x128xf32>
    %cst_13 = arith.constant 2.000000e-01 : f32
    %18 = vector.broadcast %cst_13 : f32 to vector<8x128xf32>
    %19 = arith.mulf %18, %15 : vector<8x128xf32>
    %20 = arith.select %17, %15, %19 : vector<8x128xi1>, vector<8x128xf32>
    %c0_14 = arith.constant 0 : index
    %c0_15 = arith.constant 0 : index
    %21 = vector.load %arg6[%c0_14, %c0_15] : memref<128x128xf32, #tpu.memory_space<vmem>>, vector<128x128xf32>
    %cst_16 = arith.constant dense<0.000000e+00> : vector<8x128xf32>
    %22 = tpu.matmul %20, %21, %cst_16 {dimension_numbers = #tpu.dot_dimension_numbers<[1], [0], [0], [1], [0, 0, 1, 1], [], []>} : vector<8x128xf32>, vector<128x128xf32>, vector<8x128xf32> -> vector<8x128xf32>
    %c0_17 = arith.constant 0 : index
    %c0_18 = arith.constant 0 : index
    %23 = vector.load %arg7[%c0_17, %c0_18] : memref<1x128xf32, #tpu.memory_space<vmem>>, vector<1x128xf32>
    %24 = vector.broadcast %23 : vector<1x128xf32> to vector<8x128xf32>
    %25 = arith.addf %22, %24 : vector<8x128xf32>
    %cst_19 = arith.constant 0.000000e+00 : f32
    %26 = vector.broadcast %cst_19 : f32 to vector<8x128xf32>
    %27 = arith.cmpf ogt, %25, %26 : vector<8x128xf32>
    %cst_20 = arith.constant 2.000000e-01 : f32
    %28 = vector.broadcast %cst_20 : f32 to vector<8x128xf32>
    %29 = arith.mulf %28, %25 : vector<8x128xf32>
    %30 = arith.select %27, %25, %29 : vector<8x128xi1>, vector<8x128xf32>
    %c0_21 = arith.constant 0 : index
    %c0_22 = arith.constant 0 : index
    %31 = vector.load %arg8[%c0_21, %c0_22] : memref<128x896xf32, #tpu.memory_space<vmem>>, vector<128x896xf32>
    %cst_23 = arith.constant dense<0.000000e+00> : vector<8x896xf32>
    %32 = tpu.matmul %30, %31, %cst_23 {dimension_numbers = #tpu.dot_dimension_numbers<[1], [0], [0], [1], [0, 0, 1, 1], [], []>} : vector<8x128xf32>, vector<128x896xf32>, vector<8x896xf32> -> vector<8x896xf32>
    %c0_24 = arith.constant 0 : index
    %c0_25 = arith.constant 0 : index
    %33 = vector.load %arg9[%c0_24, %c0_25] : memref<1x896xf32, #tpu.memory_space<vmem>>, vector<1x896xf32>
    %34 = vector.broadcast %33 : vector<1x896xf32> to vector<8x896xf32>
    %35 = arith.addf %32, %34 : vector<8x896xf32>
    %36 = math.tanh %35 : vector<8x896xf32>
    %c0_26 = arith.constant 0 : index
    %c0_27 = arith.constant 0 : index
    %37 = vector.load %arg10[%c0_26, %c0_27] : memref<8x896xf32, #tpu.memory_space<vmem>>, vector<8x896xf32>
    tpu.vector_store %arg10[%c0_26, %c0_27], %36 {strides = array<i32>} : memref<8x896xf32, #tpu.memory_space<vmem>>, vector<8x896xf32>,
    return
  }
  func.func @transform_0(%arg0: i32) -> (i32, i32) {
    %c0_i32 = arith.constant 0 : i32
    %c0_i32_0 = arith.constant 0 : i32
    return %arg0, %c0_i32 : i32, i32
  }
  func.func @transform_1(%arg0: i32) -> (i32, i32) {
    %c0_i32 = arith.constant 0 : i32
    %c0_i32_0 = arith.constant 0 : i32
    %c0_i32_1 = arith.constant 0 : i32
    return %c0_i32, %c0_i32_0 : i32, i32
  }
  func.func @transform_2(%arg0: i32) -> (i32, i32) {
    %c0_i32 = arith.constant 0 : i32
    %c0_i32_0 = arith.constant 0 : i32
    %c0_i32_1 = arith.constant 0 : i32
    return %c0_i32, %c0_i32_0 : i32, i32
  }
  func.func @transform_3(%arg0: i32) -> (i32, i32) {
    %c0_i32 = arith.constant 0 : i32
    %c0_i32_0 = arith.constant 0 : i32
    %c0_i32_1 = arith.constant 0 : i32
    return %c0_i32, %c0_i32_0 : i32, i32
  }
  func.func @transform_4(%arg0: i32) -> (i32, i32) {
    %c0_i32 = arith.constant 0 : i32
    %c0_i32_0 = arith.constant 0 : i32
    %c0_i32_1 = arith.constant 0 : i32
    return %c0_i32, %c0_i32_0 : i32, i32
  }
  func.func @transform_5(%arg0: i32) -> (i32, i32) {
    %c0_i32 = arith.constant 0 : i32
    %c0_i32_0 = arith.constant 0 : i32
    %c0_i32_1 = arith.constant 0 : i32
    return %c0_i32, %c0_i32_0 : i32, i32
  }
  func.func @transform_6(%arg0: i32) -> (i32, i32) {
    %c0_i32 = arith.constant 0 : i32
    %c0_i32_0 = arith.constant 0 : i32
    %c0_i32_1 = arith.constant 0 : i32
    return %c0_i32, %c0_i32_0 : i32, i32
  }
  func.func @transform_7(%arg0: i32) -> (i32, i32) {
    %c0_i32 = arith.constant 0 : i32
    %c0_i32_0 = arith.constant 0 : i32
    %c0_i32_1 = arith.constant 0 : i32
    return %c0_i32, %c0_i32_0 : i32, i32
  }
  func.func @transform_8(%arg0: i32) -> (i32, i32) {
    %c0_i32 = arith.constant 0 : i32
    %c0_i32_0 = arith.constant 0 : i32
    %c0_i32_1 = arith.constant 0 : i32
    return %c0_i32, %c0_i32_0 : i32, i32
  }
  func.func @transform_9(%arg0: i32) -> (i32, i32) {
    %c0_i32 = arith.constant 0 : i32
    %c0_i32_0 = arith.constant 0 : i32
    return %arg0, %c0_i32 : i32, i32
  }
}

</mosaic_0001>

<llo_original>
// kernel: generator_forward.1
$region0: #{generator_forward.1}
  #allocation0 [shape = 'u32[]', space=smem, size = 0x4, offset = 0x4, fixed_abs, tag = 'smem constant byte address 0x4 - core index']
  #allocation1 [shape = 'u32[144,128]{1,0:T(1,128)}', space=vmem, size = 0x12000, scoped, tag = 'internal scratch']
  %s0 = inlined_call_operand.vmem [shape: f32[8,128], index: 0, kind: input, shape index: {}]
  %s1 = inlined_call_operand.hbm [shape: f32[128,128], index: 1, kind: input, shape index: {}]
  %s2 = inlined_call_operand.vmem [shape: f32[1,128], index: 2, kind: input, shape index: {}]
  %s3 = inlined_call_operand.hbm [shape: f32[128,128], index: 3, kind: input, shape index: {}]
  %s4 = inlined_call_operand.vmem [shape: f32[1,128], index: 4, kind: input, shape index: {}]
  %s5 = inlined_call_operand.hbm [shape: f32[128,128], index: 5, kind: input, shape index: {}]
  %s6 = inlined_call_operand.vmem [shape: f32[1,128], index: 6, kind: input, shape index: {}]
  %s7 = inlined_call_operand.hbm [shape: f32[128,896], index: 7, kind: input, shape index: {}]
  %s8 = inlined_call_operand.vmem [shape: f32[1,896], index: 8, kind: input, shape index: {}]
  %s9 = inlined_call_operand.vmem [shape: f32[8,896], index: 9, kind: output, shape index: {}]
  %s10 = sld [smem:[#allocation0]]
  $region62: #{generator_forward.1} parent=0
    _
  %s12 = ssub.s32 1, %s10
  %s13 = scalar_select 0, %s12, %s10
  $region1: #{generator_forward.1} parent=0
    #allocation2 [shape = 'u8[65536]{0}', space=vmem, size = 0x10000, scoped, tag = 'input window, operand 1, single buffered']
    #allocation3 [shape = 's32[1]{0}', space=sflag, size = 0x4, scoped, tag = 'scoped memory for generator_forward.1']
    #allocation4 [shape = 'u8[65536]{0}', space=vmem, size = 0x10000, scoped, tag = 'input window, operand 3, single buffered']
    #allocation5 [shape = 's32[1]{0}', space=sflag, size = 0x4, scoped, tag = 'scoped memory for generator_forward.1']
    #allocation6 [shape = 'u8[65536]{0}', space=vmem, size = 0x10000, scoped, tag = 'input window, operand 5, single buffered']
    #allocation7 [shape = 'u8[458752]{0}', space=vmem, size = 0x70000, scoped, tag = 'input window, operand 7, single buffered']
    #allocation8 [shape = 's32[1]{0}', space=sflag, size = 0x4, scoped, tag = 'scoped memory for generator_forward.1']
    %14 = vsyncpa [#allocation3], 0
    %15 = vsyncpa [#allocation5], 0
    %16 = vsyncpa [#allocation8], 0
    // Predicated region
    $region2: #{generator_forward.1} parent=1 // pred_check
      _
    $region3: #{generator_forward.1} parent=1 // pred_check_branch
      %18 = sbr.rel (0) target = $region5
    $region4: #{generator_forward.1} parent=1 // pred_region
      _
    $region5: #{generator_forward.1} parent=1 // pred_fallthru
      _
    // Predicated region
    $region6: #{generator_forward.1} parent=1 // pred_check
      _
    $region7: #{generator_forward.1} parent=1 // pred_check_branch
      %20 = sbr.rel (0) target = $region9
    $region8: #{generator_forward.1} parent=1 // pred_region
      %s22 = ssub.s32 2048, 2048
      %23 = vsyncadd [#allocation3], %s22
      %s24 = sshll.u32 [#allocation2], 4
      %s25 = int_to_ptr.vmem [resolvable:$true] %s24
      %30 = dma.hbm_to_vmem [thread:$0]  %s1, 2048, %s25, [#allocation3], 128, 128, 8
    $region9: #{generator_forward.1} parent=1 // pred_fallthru
      _
    // Predicated region
    $region10: #{generator_forward.1} parent=1 // pred_check
      _
    $region11: #{generator_forward.1} parent=1 // pred_check_branch
      %32 = sbr.rel (0) target = $region13
    $region12: #{generator_forward.1} parent=1 // pred_region
      _
    $region13: #{generator_forward.1} parent=1 // pred_fallthru
      _
    // Predicated region
    $region14: #{generator_forward.1} parent=1 // pred_check
      _
    $region15: #{generator_forward.1} parent=1 // pred_check_branch
      %34 = sbr.rel (0) target = $region17
    $region16: #{generator_forward.1} parent=1 // pred_region
      %s36 = ssub.s32 2048, 2048
      %37 = vsyncadd [#allocation5], %s36
      %s38 = sshll.u32 [#allocation4], 4
      %s39 = int_to_ptr.vmem [resolvable:$true] %s38
      %44 = dma.hbm_to_vmem [thread:$0]  %s3, 2048, %s39, [#allocation5], 128, 128, 8
    $region17: #{generator_forward.1} parent=1 // pred_fallthru
      _
    // Predicated region
    $region18: #{generator_forward.1} parent=1 // pred_check
      _
    $region19: #{generator_forward.1} parent=1 // pred_check_branch
      %46 = sbr.rel (0) target = $region21
    $region20: #{generator_forward.1} parent=1 // pred_region
      _
    $region21: #{generator_forward.1} parent=1 // pred_fallthru
      _
    // Predicated region
    $region22: #{generator_forward.1} parent=1 // pred_check
      _
    $region23: #{generator_forward.1} parent=1 // pred_check_branch
      %48 = sbr.rel (0) target = $region25
    $region24: #{generator_forward.1} parent=1 // pred_region
      %s50 = ssub.s32 2048, 2048
      %51 = vsyncadd [#allocation5], %s50
      %s52 = sshll.u32 [#allocation6], 4
      %s53 = int_to_ptr.vmem [resolvable:$true] %s52
      %58 = dma.hbm_to_vmem [thread:$0]  %s5, 2048, %s53, [#allocation5], 128, 128, 8
    $region25: #{generator_forward.1} parent=1 // pred_fallthru
      _
    // Predicated region
    $region26: #{generator_forward.1} parent=1 // pred_check
      _
    $region27: #{generator_forward.1} parent=1 // pred_check_branch
      %60 = sbr.rel (0) target = $region29
    $region28: #{generator_forward.1} parent=1 // pred_region
      _
    $region29: #{generator_forward.1} parent=1 // pred_fallthru
      _
    // Predicated region
    $region30: #{generator_forward.1} parent=1 // pred_check
      _
    $region31: #{generator_forward.1} parent=1 // pred_check_branch
      %62 = sbr.rel (0) target = $region33
    $region32: #{generator_forward.1} parent=1 // pred_region
      %s64 = ssub.s32 14336, 14336
      %65 = vsyncadd [#allocation8], %s64
      %s66 = sshll.u32 [#allocation7], 4
      %s67 = int_to_ptr.vmem [resolvable:$true] %s66
      %72 = dma.hbm_to_vmem [thread:$0]  %s7, 14336, %s67, [#allocation8], 896, 896, 56
    $region33: #{generator_forward.1} parent=1 // pred_fallthru
      _
    // Predicated region
    $region34: #{generator_forward.1} parent=1 // pred_check
      _
    $region35: #{generator_forward.1} parent=1 // pred_check_branch
      %74 = sbr.rel (0) target = $region37
    $region36: #{generator_forward.1} parent=1 // pred_region
      _
    $region37: #{generator_forward.1} parent=1 // pred_fallthru
      _
    // Predicated region
    $region38: #{generator_forward.1} parent=1 // pred_check
      _
    $region39: #{generator_forward.1} parent=1 // pred_check_branch
      %76 = sbr.rel (0) target = $region41
    $region40: #{generator_forward.1} parent=1 // pred_region
      %77 = dma.done [#allocation3], 2048
    $region41: #{generator_forward.1} parent=1 // pred_fallthru
      _
    // Predicated region
    $region42: #{generator_forward.1} parent=1 // pred_check
      _
    $region43: #{generator_forward.1} parent=1 // pred_check_branch
      %79 = sbr.rel (0) target = $region45
    $region44: #{generator_forward.1} parent=1 // pred_region
      %80 = dma.done [#allocation5], 2048
    $region45: #{generator_forward.1} parent=1 // pred_fallthru
      _
    // Predicated region
    $region46: #{generator_forward.1} parent=1 // pred_check
      _
    $region47: #{generator_forward.1} parent=1 // pred_check_branch
      %82 = sbr.rel (0) target = $region49
    $region48: #{generator_forward.1} parent=1 // pred_region
      %83 = dma.done [#allocation5], 2048
    $region49: #{generator_forward.1} parent=1 // pred_fallthru
      _
    // Predicated region
    $region50: #{generator_forward.1} parent=1 // pred_check
      _
    $region51: #{generator_forward.1} parent=1 // pred_check_branch
      %85 = sbr.rel (0) target = $region53
    $region52: #{generator_forward.1} parent=1 // pred_region
      %86 = dma.done [#allocation8], 14336
    $region53: #{generator_forward.1} parent=1 // pred_fallthru
      _
    %v87 = vld [vmem:[%s0] sm:$0xff]
    %v88 = vld [vmem:[#allocation2] sm:$0xff]
    %v89 = vld [vmem:[#allocation2 + $0x8] sm:$0xff]
    %v90 = vld [vmem:[#allocation2 + $0x10] sm:$0xff]
    %v91 = vld [vmem:[#allocation2 + $0x18] sm:$0xff]
    %v92 = vld [vmem:[#allocation2 + $0x20] sm:$0xff]
    %v93 = vld [vmem:[#allocation2 + $0x28] sm:$0xff]
    %v94 = vld [vmem:[#allocation2 + $0x30] sm:$0xff]
    %v95 = vld [vmem:[#allocation2 + $0x38] sm:$0xff]
    %v96 = vld [vmem:[#allocation2 + $0x40] sm:$0xff]
    %v97 = vld [vmem:[#allocation2 + $0x48] sm:$0xff]
    %v98 = vld [vmem:[#allocation2 + $0x50] sm:$0xff]
    %v99 = vld [vmem:[#allocation2 + $0x58] sm:$0xff]
    %v100 = vld [vmem:[#allocation2 + $0x60] sm:$0xff]
    %v101 = vld [vmem:[#allocation2 + $0x68] sm:$0xff]
    %v102 = vld [vmem:[#allocation2 + $0x70] sm:$0xff]
    %v103 = vld [vmem:[#allocation2 + $0x78] sm:$0xff]
    %v104 = vld [vmem:[%s2] sm:$0x1]
    %v106 = vlaneseq
    %v107 = vshrl.u32 %v106, 7
    %v108 = vsub.s32 0, %v107
    %v109 = vrot.slane %v104, %v108
    %111 = vmatprep.subr.mxu0 0.0
    %112 = vmatpush1.msra.mxu0 %v88
    %113 = vmatprep.subr.mxu0 0.0
    %114 = vmatpush1.msra.mxu0 %v89
    %115 = vmatprep.subr.mxu0 0.0
    %116 = vmatpush1.msra.mxu0 %v90
    %117 = vmatprep.subr.mxu0 0.0
    %118 = vmatpush1.msra.mxu0 %v91
    %119 = vmatprep.subr.mxu0 0.0
    %120 = vmatpush1.msra.mxu0 %v92
    %121 = vmatprep.subr.mxu0 0.0
    %122 = vmatpush1.msra.mxu0 %v93
    %123 = vmatprep.subr.mxu0 0.0
    %124 = vmatpush1.msra.mxu0 %v94
    %125 = vmatprep.subr.mxu0 0.0
    %126 = vmatpush1.msra.mxu0 %v95
    %127 = vmatprep.subr.mxu0 0.0
    %128 = vmatpush1.msra.mxu0 %v96
    %129 = vmatprep.subr.mxu0 0.0
    %130 = vmatpush1.msra.mxu0 %v97
    %131 = vmatprep.subr.mxu0 0.0
    %132 = vmatpush1.msra.mxu0 %v98
    %133 = vmatprep.subr.mxu0 0.0
    %134 = vmatpush1.msra.mxu0 %v99
    %135 = vmatprep.subr.mxu0 0.0
    %136 = vmatpush1.msra.mxu0 %v100
    %137 = vmatprep.subr.mxu0 0.0
    %138 = vmatpush1.msra.mxu0 %v101
    %139 = vmatprep.subr.mxu0 0.0
    %140 = vmatpush1.msra.mxu0 %v102
    %141 = vmatprep.subr.mxu0 0.0
    %142 = vmatpush1.msra.mxu0 %v103
    %143 = vmatprep.subr.mxu0 0.0
    %144 = vmatpush1.msra.mxu0 0.0
    %145 = vmatprep.subr.mxu0 0.0
    %146 = vmatpush1.msra.mxu0 0.0
    %147 = vmatprep.subr.mxu0 0.0
    %148 = vmatpush1.msra.mxu0 0.0
    %149 = vmatprep.subr.mxu0 0.0
    %150 = vmatpush1.msra.mxu0 0.0
    %151 = vmatprep.subr.mxu0 0.0
    %152 = vmatpush1.msra.mxu0 0.0
    %153 = vmatprep.subr.mxu0 0.0
    %154 = vmatpush1.msra.mxu0 0.0
    %155 = vmatprep.subr.mxu0 0.0
    %156 = vmatpush1.msra.mxu0 0.0
    %157 = vmatprep.subr.mxu0 0.0
    %158 = vmatpush1.msra.mxu0 0.0
    %159 = vmatprep.subr.mxu0 0.0
    %160 = vmatpush1.msra.mxu0 0.0
    %161 = vmatprep.subr.mxu0 0.0
    %162 = vmatpush1.msra.mxu0 0.0
    %163 = vmatprep.subr.mxu0 0.0
    %164 = vmatpush1.msra.mxu0 0.0
    %165 = vmatprep.subr.mxu0 0.0
    %166 = vmatpush1.msra.mxu0 0.0
    %167 = vmatprep.subr.mxu0 0.0
    %168 = vmatpush1.msra.mxu0 0.0
    %169 = vmatprep.subr.mxu0 0.0
    %170 = vmatpush1.msra.mxu0 0.0
    %171 = vmatprep.subr.mxu0 0.0
    %172 = vmatpush1.msra.mxu0 0.0
    %173 = vmatprep.subr.mxu0 0.0
    %174 = vmatpush1.msra.mxu0 0.0
    %175 = vmatprep.mubr.f32.mxu0 0.0
    %176 = vmatmul.mubr.f32.gmra.mrb[0].mxu0 %v87
    %v177 = vpop.f32.mrb[0].mxu0
    %v178 = vadd.f32 %v109, %v177
    %v179 = vpop.f32.mrb[0].mxu0
    %180 = vdwg.mxu0
    %vm181 = vcmp.gt.f32.partialorder %v178, 0.0
    %v182 = vmul.f32 %v178, 0.2
    %v183 = vsel %vm181, %v178, %v182
    %v184 = vld [vmem:[#allocation4] sm:$0xff]
    %v185 = vld [vmem:[#allocation4 + $0x8] sm:$0xff]
    %v186 = vld [vmem:[#allocation4 + $0x10] sm:$0xff]
    %v187 = vld [vmem:[#allocation4 + $0x18] sm:$0xff]
    %v188 = vld [vmem:[#allocation4 + $0x20] sm:$0xff]
    %v189 = vld [vmem:[#allocation4 + $0x28] sm:$0xff]
    %v190 = vld [vmem:[#allocation4 + $0x30] sm:$0xff]
    %v191 = vld [vmem:[#allocation4 + $0x38] sm:$0xff]
    %v192 = vld [vmem:[#allocation4 + $0x40] sm:$0xff]
    %v193 = vld [vmem:[#allocation4 + $0x48] sm:$0xff]
    %v194 = vld [vmem:[#allocation4 + $0x50] sm:$0xff]
    %v195 = vld [vmem:[#allocation4 + $0x58] sm:$0xff]
    %v196 = vld [vmem:[#allocation4 + $0x60] sm:$0xff]
    %v197 = vld [vmem:[#allocation4 + $0x68] sm:$0xff]
    %v198 = vld [vmem:[#allocation4 + $0x70] sm:$0xff]
    %v199 = vld [vmem:[#allocation4 + $0x78] sm:$0xff]
    %v200 = vld [vmem:[%s4] sm:$0x1]
    %v202 = vlaneseq
    %v203 = vshrl.u32 %v202, 7
    %v204 = vsub.s32 0, %v203
    %v205 = vrot.slane %v200, %v204
    %207 = vmatprep.subr.mxu0 0.0
    %208 = vmatpush1.msra.mxu0 %v184
    %209 = vmatprep.subr.mxu0 0.0
    %210 = vmatpush1.msra.mxu0 %v185
    %211 = vmatprep.subr.mxu0 0.0
    %212 = vmatpush1.msra.mxu0 %v186
    %213 = vmatprep.subr.mxu0 0.0
    %214 = vmatpush1.msra.mxu0 %v187
    %215 = vmatprep.subr.mxu0 0.0
    %216 = vmatpush1.msra.mxu0 %v188
    %217 = vmatprep.subr.mxu0 0.0
    %218 = vmatpush1.msra.mxu0 %v189
    %219 = vmatprep.subr.mxu0 0.0
    %220 = vmatpush1.msra.mxu0 %v190
    %221 = vmatprep.subr.mxu0 0.0
    %222 = vmatpush1.msra.mxu0 %v191
    %223 = vmatprep.subr.mxu0 0.0
    %224 = vmatpush1.msra.mxu0 %v192
    %225 = vmatprep.subr.mxu0 0.0
    %226 = vmatpush1.msra.mxu0 %v193
    %227 = vmatprep.subr.mxu0 0.0
    %228 = vmatpush1.msra.mxu0 %v194
    %229 = vmatprep.subr.mxu0 0.0
    %230 = vmatpush1.msra.mxu0 %v195
    %231 = vmatprep.subr.mxu0 0.0
    %232 = vmatpush1.msra.mxu0 %v196
    %233 = vmatprep.subr.mxu0 0.0
    %234 = vmatpush1.msra.mxu0 %v197
    %235 = vmatprep.subr.mxu0 0.0
    %236 = vmatpush1.msra.mxu0 %v198
    %237 = vmatprep.subr.mxu0 0.0
    %238 = vmatpush1.msra.mxu0 %v199
    %239 = vmatprep.subr.mxu0 0.0
    %240 = vmatpush1.msra.mxu0 0.0
    %241 = vmatprep.subr.mxu0 0.0
    %242 = vmatpush1.msra.mxu0 0.0
    %243 = vmatprep.subr.mxu0 0.0
    %244 = vmatpush1.msra.mxu0 0.0
    %245 = vmatprep.subr.mxu0 0.0
    %246 = vmatpush1.msra.mxu0 0.0
    %247 = vmatprep.subr.mxu0 0.0
    %248 = vmatpush1.msra.mxu0 0.0
    %249 = vmatprep.subr.mxu0 0.0
    %250 = vmatpush1.msra.mxu0 0.0
    %251 = vmatprep.subr.mxu0 0.0
    %252 = vmatpush1.msra.mxu0 0.0
    %253 = vmatprep.subr.mxu0 0.0
    %254 = vmatpush1.msra.mxu0 0.0
    %255 = vmatprep.subr.mxu0 0.0
    %256 = vmatpush1.msra.mxu0 0.0
    %257 = vmatprep.subr.mxu0 0.0
    %258 = vmatpush1.msra.mxu0 0.0
    %259 = vmatprep.subr.mxu0 0.0
    %260 = vmatpush1.msra.mxu0 0.0
    %261 = vmatprep.subr.mxu0 0.0
    %262 = vmatpush1.msra.mxu0 0.0
    %263 = vmatprep.subr.mxu0 0.0
    %264 = vmatpush1.msra.mxu0 0.0
    %265 = vmatprep.subr.mxu0 0.0
    %266 = vmatpush1.msra.mxu0 0.0
    %267 = vmatprep.subr.mxu0 0.0
    %268 = vmatpush1.msra.mxu0 0.0
    %269 = vmatprep.subr.mxu0 0.0
    %270 = vmatpush1.msra.mxu0 0.0
    %271 = vmatprep.mubr.f32.mxu0 0.0
    %272 = vmatmul.mubr.f32.gmra.mrb[0].mxu0 %v183
    %v273 = vpop.f32.mrb[0].mxu0
    %v274 = vadd.f32 %v205, %v273
    %v275 = vpop.f32.mrb[0].mxu0
    %276 = vdwg.mxu0
    %vm277 = vcmp.gt.f32.partialorder %v274, 0.0
    %v278 = vmul.f32 %v274, 0.2
    %v279 = vsel %vm277, %v274, %v278
    %v280 = vld [vmem:[#allocation6] sm:$0xff]
    %v281 = vld [vmem:[#allocation6 + $0x8] sm:$0xff]
    %v282 = vld [vmem:[#allocation6 + $0x10] sm:$0xff]
    %v283 = vld [vmem:[#allocation6 + $0x18] sm:$0xff]
    %v284 = vld [vmem:[#allocation6 + $0x20] sm:$0xff]
    %v285 = vld [vmem:[#allocation6 + $0x28] sm:$0xff]
    %v286 = vld [vmem:[#allocation6 + $0x30] sm:$0xff]
    %v287 = vld [vmem:[#allocation6 + $0x38] sm:$0xff]
    %v288 = vld [vmem:[#allocation6 + $0x40] sm:$0xff]
    %v289 = vld [vmem:[#allocation6 + $0x48] sm:$0xff]
    %v290 = vld [vmem:[#allocation6 + $0x50] sm:$0xff]
    %v291 = vld [vmem:[#allocation6 + $0x58] sm:$0xff]
    %v292 = vld [vmem:[#allocation6 + $0x60] sm:$0xff]
    %v293 = vld [vmem:[#allocation6 + $0x68] sm:$0xff]
    %v294 = vld [vmem:[#allocation6 + $0x70] sm:$0xff]
    %v295 = vld [vmem:[#allocation6 + $0x78] sm:$0xff]
    %v296 = vld [vmem:[%s6] sm:$0x1]
    %v298 = vlaneseq
    %v299 = vshrl.u32 %v298, 7
    %v300 = vsub.s32 0, %v299
    %v301 = vrot.slane %v296, %v300
    %303 = vmatprep.subr.mxu0 0.0
    %304 = vmatpush1.msra.mxu0 %v280
    %305 = vmatprep.subr.mxu0 0.0
    %306 = vmatpush1.msra.mxu0 %v281
    %307 = vmatprep.subr.mxu0 0.0
    %308 = vmatpush1.msra.mxu0 %v282
    %309 = vmatprep.subr.mxu0 0.0
    %310 = vmatpush1.msra.mxu0 %v283
    %311 = vmatprep.subr.mxu0 0.0
    %312 = vmatpush1.msra.mxu0 %v284
    %313 = vmatprep.subr.mxu0 0.0
    %314 = vmatpush1.msra.mxu0 %v285
    %315 = vmatprep.subr.mxu0 0.0
    %316 = vmatpush1.msra.mxu0 %v286
    %317 = vmatprep.subr.mxu0 0.0
    %318 = vmatpush1.msra.mxu0 %v287
    %319 = vmatprep.subr.mxu0 0.0
    %320 = vmatpush1.msra.mxu0 %v288
    %321 = vmatprep.subr.mxu0 0.0
    %322 = vmatpush1.msra.mxu0 %v289
    %323 = vmatprep.subr.mxu0 0.0
    %324 = vmatpush1.msra.mxu0 %v290
    %325 = vmatprep.subr.mxu0 0.0
    %326 = vmatpush1.msra.mxu0 %v291
    %327 = vmatprep.subr.mxu0 0.0
    %328 = vmatpush1.msra.mxu0 %v292
    %329 = vmatprep.subr.mxu0 0.0
    %330 = vmatpush1.msra.mxu0 %v293
    %331 = vmatprep.subr.mxu0 0.0
    %332 = vmatpush1.msra.mxu0 %v294
    %333 = vmatprep.subr.mxu0 0.0
    %334 = vmatpush1.msra.mxu0 %v295
    %335 = vmatprep.subr.mxu0 0.0
    %336 = vmatpush1.msra.mxu0 0.0
    %337 = vmatprep.subr.mxu0 0.0
    %338 = vmatpush1.msra.mxu0 0.0
    %339 = vmatprep.subr.mxu0 0.0
    %340 = vmatpush1.msra.mxu0 0.0
    %341 = vmatprep.subr.mxu0 0.0
    %342 = vmatpush1.msra.mxu0 0.0
    %343 = vmatprep.subr.mxu0 0.0
    %344 = vmatpush1.msra.mxu0 0.0
    %345 = vmatprep.subr.mxu0 0.0
    %346 = vmatpush1.msra.mxu0 0.0
    %347 = vmatprep.subr.mxu0 0.0
    %348 = vmatpush1.msra.mxu0 0.0
    %349 = vmatprep.subr.mxu0 0.0
    %350 = vmatpush1.msra.mxu0 0.0
    %351 = vmatprep.subr.mxu0 0.0
    %352 = vmatpush1.msra.mxu0 0.0
    %353 = vmatprep.subr.mxu0 0.0
    %354 = vmatpush1.msra.mxu0 0.0
    %355 = vmatprep.subr.mxu0 0.0
    %356 = vmatpush1.msra.mxu0 0.0
    %357 = vmatprep.subr.mxu0 0.0
    %358 = vmatpush1.msra.mxu0 0.0
    %359 = vmatprep.subr.mxu0 0.0
    %360 = vmatpush1.msra.mxu0 0.0
    %361 = vmatprep.subr.mxu0 0.0
    %362 = vmatpush1.msra.mxu0 0.0
    %363 = vmatprep.subr.mxu0 0.0
    %364 = vmatpush1.msra.mxu0 0.0
    %365 = vmatprep.subr.mxu0 0.0
    %366 = vmatpush1.msra.mxu0 0.0
    %367 = vmatprep.mubr.f32.mxu0 0.0
    %368 = vmatmul.mubr.f32.gmra.mrb[0].mxu0 %v279
    %v369 = vpop.f32.mrb[0].mxu0
    %v370 = vadd.f32 %v301, %v369
    %v371 = vpop.f32.mrb[0].mxu0
    %372 = vdwg.mxu0
    %vm373 = vcmp.gt.f32.partialorder %v370, 0.0
    %v374 = vmul.f32 %v370, 0.2
    %v375 = vsel %vm373, %v370, %v374
    %v376 = vld [vmem:[#allocation7] sm:$0xff]
    %v377 = vld [vmem:[#allocation7 + $0x8] sm:$0xff]
    %v378 = vld [vmem:[#allocation7 + $0x10] sm:$0xff]
    %v379 = vld [vmem:[#allocation7 + $0x18] sm:$0xff]
    %v380 = vld [vmem:[#allocation7 + $0x20] sm:$0xff]
    %v381 = vld [vmem:[#allocation7 + $0x28] sm:$0xff]
    %v382 = vld [vmem:[#allocation7 + $0x30] sm:$0xff]
    %v383 = vld [vmem:[#allocation7 + $0x38] sm:$0xff]
    %v384 = vld [vmem:[#allocation7 + $0x40] sm:$0xff]
    %v385 = vld [vmem:[#allocation7 + $0x48] sm:$0xff]
    %v386 = vld [vmem:[#allocation7 + $0x50] sm:$0xff]
    %v387 = vld [vmem:[#allocation7 + $0x58] sm:$0xff]
    %v388 = vld [vmem:[#allocation7 + $0x60] sm:$0xff]
    %v389 = vld [vmem:[#allocation7 + $0x68] sm:$0xff]
    %v390 = vld [vmem:[#allocation7 + $0x70] sm:$0xff]
    %v391 = vld [vmem:[#allocation7 + $0x78] sm:$0xff]
    %v392 = vld [vmem:[#allocation7 + $0x80] sm:$0xff]
    %v393 = vld [vmem:[#allocation7 + $0x88] sm:$0xff]
    %v394 = vld [vmem:[#allocation7 + $0x90] sm:$0xff]
    %v395 = vld [vmem:[#allocation7 + $0x98] sm:$0xff]
    %v396 = vld [vmem:[#allocation7 + $0xa0] sm:$0xff]
    %v397 = vld [vmem:[#allocation7 + $0xa8] sm:$0xff]
    %v398 = vld [vmem:[#allocation7 + $0xb0] sm:$0xff]
    %v399 = vld [vmem:[#allocation7 + $0xb8] sm:$0xff]
    %v400 = vld [vmem:[#allocation7 + $0xc0] sm:$0xff]
    %v401 = vld [vmem:[#allocation7 + $0xc8] sm:$0xff]
    %v402 = vld [vmem:[#allocation7 + $0xd0] sm:$0xff]
    %v403 = vld [vmem:[#allocation7 + $0xd8] sm:$0xff]
    %v404 = vld [vmem:[#allocation7 + $0xe0] sm:$0xff]
    %v405 = vld [vmem:[#allocation7 + $0xe8] sm:$0xff]
    %v406 = vld [vmem:[#allocation7 + $0xf0] sm:$0xff]
    %v407 = vld [vmem:[#allocation7 + $0xf8] sm:$0xff]
    %v408 = vld [vmem:[#allocation7 + $0x100] sm:$0xff]
    %v409 = vld [vmem:[#allocation7 + $0x108] sm:$0xff]
    %v410 = vld [vmem:[#allocation7 + $0x110] sm:$0xff]
    %v411 = vld [vmem:[#allocation7 + $0x118] sm:$0xff]
    %v412 = vld [vmem:[#allocation7 + $0x120] sm:$0xff]
    %v413 = vld [vmem:[#allocation7 + $0x128] sm:$0xff]
    %v414 = vld [vmem:[#allocation7 + $0x130] sm:$0xff]
    %v415 = vld [vmem:[#allocation7 + $0x138] sm:$0xff]
    %v416 = vld [vmem:[#allocation7 + $0x140] sm:$0xff]
    %v417 = vld [vmem:[#allocation7 + $0x148] sm:$0xff]
    %v418 = vld [vmem:[#allocation7 + $0x150] sm:$0xff]
    %v419 = vld [vmem:[#allocation7 + $0x158] sm:$0xff]
    %v420 = vld [vmem:[#allocation7 + $0x160] sm:$0xff]
    %v421 = vld [vmem:[#allocation7 + $0x168] sm:$0xff]
    %v422 = vld [vmem:[#allocation7 + $0x170] sm:$0xff]
    %v423 = vld [vmem:[#allocation7 + $0x178] sm:$0xff]
    %v424 = vld [vmem:[#allocation7 + $0x180] sm:$0xff]
    %v425 = vld [vmem:[#allocation7 + $0x188] sm:$0xff]
    %v426 = vld [vmem:[#allocation7 + $0x190] sm:$0xff]
    %v427 = vld [vmem:[#allocation7 + $0x198] sm:$0xff]
    %v428 = vld [vmem:[#allocation7 + $0x1a0] sm:$0xff]
    %v429 = vld [vmem:[#allocation7 + $0x1a8] sm:$0xff]
    %v430 = vld [vmem:[#allocation7 + $0x1b0] sm:$0xff]
    %v431 = vld [vmem:[#allocation7 + $0x1b8] sm:$0xff]
    %v432 = vld [vmem:[#allocation7 + $0x1c0] sm:$0xff]
    %v433 = vld [vmem:[#allocation7 + $0x1c8] sm:$0xff]
    %v434 = vld [vmem:[#allocation7 + $0x1d0] sm:$0xff]
    %v435 = vld [vmem:[#allocation7 + $0x1d8] sm:$0xff]
    %v436 = vld [vmem:[#allocation7 + $0x1e0] sm:$0xff]
    %v437 = vld [vmem:[#allocation7 + $0x1e8] sm:$0xff]
    %v438 = vld [vmem:[#allocation7 + $0x1f0] sm:$0xff]
    %v439 = vld [vmem:[#allocation7 + $0x1f8] sm:$0xff]
    %v440 = vld [vmem:[#allocation7 + $0x200] sm:$0xff]
    %v441 = vld [vmem:[#allocation7 + $0x208] sm:$0xff]
    %v442 = vld [vmem:[#allocation7 + $0x210] sm:$0xff]
    %v443 = vld [vmem:[#allocation7 + $0x218] sm:$0xff]
    %v444 = vld [vmem:[#allocation7 + $0x220] sm:$0xff]
    %v445 = vld [vmem:[#allocation7 + $0x228] sm:$0xff]
    %v446 = vld [vmem:[#allocation7 + $0x230] sm:$0xff]
    %v447 = vld [vmem:[#allocation7 + $0x238] sm:$0xff]
    %v448 = vld [vmem:[#allocation7 + $0x240] sm:$0xff]
    %v449 = vld [vmem:[#allocation7 + $0x248] sm:$0xff]
    %v450 = vld [vmem:[#allocation7 + $0x250] sm:$0xff]
    %v451 = vld [vmem:[#allocation7 + $0x258] sm:$0xff]
    %v452 = vld [vmem:[#allocation7 + $0x260] sm:$0xff]
    %v453 = vld [vmem:[#allocation7 + $0x268] sm:$0xff]
    %v454 = vld [vmem:[#allocation7 + $0x270] sm:$0xff]
    %v455 = vld [vmem:[#allocation7 + $0x278] sm:$0xff]
    %v456 = vld [vmem:[#allocation7 + $0x280] sm:$0xff]
    %v457 = vld [vmem:[#allocation7 + $0x288] sm:$0xff]
    %v458 = vld [vmem:[#allocation7 + $0x290] sm:$0xff]
    %v459 = vld [vmem:[#allocation7 + $0x298] sm:$0xff]
    %v460 = vld [vmem:[#allocation7 + $0x2a0] sm:$0xff]
    %v461 = vld [vmem:[#allocation7 + $0x2a8] sm:$0xff]
    %v462 = vld [vmem:[#allocation7 + $0x2b0] sm:$0xff]
    %v463 = vld [vmem:[#allocation7 + $0x2b8] sm:$0xff]
    %v464 = vld [vmem:[#allocation7 + $0x2c0] sm:$0xff]
    %v465 = vld [vmem:[#allocation7 + $0x2c8] sm:$0xff]
    %v466 = vld [vmem:[#allocation7 + $0x2d0] sm:$0xff]
    %v467 = vld [vmem:[#allocation7 + $0x2d8] sm:$0xff]
    %v468 = vld [vmem:[#allocation7 + $0x2e0] sm:$0xff]
    %v469 = vld [vmem:[#allocation7 + $0x2e8] sm:$0xff]
    %v470 = vld [vmem:[#allocation7 + $0x2f0] sm:$0xff]
    %v471 = vld [vmem:[#allocation7 + $0x2f8] sm:$0xff]
    %v472 = vld [vmem:[#allocation7 + $0x300] sm:$0xff]
    %v473 = vld [vmem:[#allocation7 + $0x308] sm:$0xff]
    %v474 = vld [vmem:[#allocation7 + $0x310] sm:$0xff]
    %v475 = vld [vmem:[#allocation7 + $0x318] sm:$0xff]
    %v476 = vld [vmem:[#allocation7 + $0x320] sm:$0xff]
    %v477 = vld [vmem:[#allocation7 + $0x328] sm:$0xff]
    %v478 = vld [vmem:[#allocation7 + $0x330] sm:$0xff]
    %v479 = vld [vmem:[#allocation7 + $0x338] sm:$0xff]
    %v480 = vld [vmem:[#allocation7 + $0x340] sm:$0xff]
    %v481 = vld [vmem:[#allocation7 + $0x348] sm:$0xff]
    %v482 = vld [vmem:[#allocation7 + $0x350] sm:$0xff]
    %v483 = vld [vmem:[#allocation7 + $0x358] sm:$0xff]
    %v484 = vld [vmem:[#allocation7 + $0x360] sm:$0xff]
    %v485 = vld [vmem:[#allocation7 + $0x368] sm:$0xff]
    %v486 = vld [vmem:[#allocation7 + $0x370] sm:$0xff]
    %v487 = vld [vmem:[#allocation7 + $0x378] sm:$0xff]
    %v488 = vld [vmem:[%s8] sm:$0xff]
    %v490 = vlaneseq
    %v491 = vshrl.u32 %v490, 7
    %v492 = vsub.s32 0, %v491
    %v493 = vrot.slane %v488, %v492
    %v494 = vlaneseq
    %v495 = vshrl.u32 %v494, 7
    %v496 = vsub.s32 1, %v495
    %v497 = vrot.slane %v488, %v496
    %v498 = vlaneseq
    %v499 = vshrl.u32 %v498, 7
    %v500 = vsub.s32 2, %v499
    %v501 = vrot.slane %v488, %v500
    %v502 = vlaneseq
    %v503 = vshrl.u32 %v502, 7
    %v504 = vsub.s32 3, %v503
    %v505 = vrot.slane %v488, %v504
    %v506 = vlaneseq
    %v507 = vshrl.u32 %v506, 7
    %v508 = vsub.s32 4, %v507
    %v509 = vrot.slane %v488, %v508
    %v510 = vlaneseq
    %v511 = vshrl.u32 %v510, 7
    %v512 = vsub.s32 5, %v511
    %v513 = vrot.slane %v488, %v512
    %v514 = vlaneseq
    %v515 = vshrl.u32 %v514, 7
    %v516 = vsub.s32 6, %v515
    %v517 = vrot.slane %v488, %v516
    %525 = vmatprep.subr.mxu0 %v377
    %526 = vmatpush1.msra.mxu0 %v376
    %527 = vmatprep.subr.mxu0 %v384
    %528 = vmatpush1.msra.mxu0 %v383
    %529 = vmatprep.subr.mxu0 %v391
    %530 = vmatpush1.msra.mxu0 %v390
    %531 = vmatprep.subr.mxu0 %v398
    %532 = vmatpush1.msra.mxu0 %v397
    %533 = vmatprep.subr.mxu0 %v405
    %534 = vmatpush1.msra.mxu0 %v404
    %535 = vmatprep.subr.mxu0 %v412
    %536 = vmatpush1.msra.mxu0 %v411
    %537 = vmatprep.subr.mxu0 %v419
    %538 = vmatpush1.msra.mxu0 %v418
    %539 = vmatprep.subr.mxu0 %v426
    %540 = vmatpush1.msra.mxu0 %v425
    %541 = vmatprep.subr.mxu0 %v433
    %542 = vmatpush1.msra.mxu0 %v432
    %543 = vmatprep.subr.mxu0 %v440
    %544 = vmatpush1.msra.mxu0 %v439
    %545 = vmatprep.subr.mxu0 %v447
    %546 = vmatpush1.msra.mxu0 %v446
    %547 = vmatprep.subr.mxu0 %v454
    %548 = vmatpush1.msra.mxu0 %v453
    %549 = vmatprep.subr.mxu0 %v461
    %550 = vmatpush1.msra.mxu0 %v460
    %551 = vmatprep.subr.mxu0 %v468
    %552 = vmatpush1.msra.mxu0 %v467
    %553 = vmatprep.subr.mxu0 %v475
    %554 = vmatpush1.msra.mxu0 %v474
    %555 = vmatprep.subr.mxu0 %v482
    %556 = vmatpush1.msra.mxu0 %v481
    %557 = vmatprep.subr.mxu0 0.0
    %558 = vmatpush1.msra.mxu0 0.0
    %559 = vmatprep.subr.mxu0 0.0
    %560 = vmatpush1.msra.mxu0 0.0
    %561 = vmatprep.subr.mxu0 0.0
    %562 = vmatpush1.msra.mxu0 0.0
    %563 = vmatprep.subr.mxu0 0.0
    %564 = vmatpush1.msra.mxu0 0.0
    %565 = vmatprep.subr.mxu0 0.0
    %566 = vmatpush1.msra.mxu0 0.0
    %567 = vmatprep.subr.mxu0 0.0
    %568 = vmatpush1.msra.mxu0 0.0
    %569 = vmatprep.subr.mxu0 0.0
    %570 = vmatpush1.msra.mxu0 0.0
    %571 = vmatprep.subr.mxu0 0.0
    %572 = vmatpush1.msra.mxu0 0.0
    %573 = vmatprep.subr.mxu0 0.0
    %574 = vmatpush1.msra.mxu0 0.0
    %575 = vmatprep.subr.mxu0 0.0
    %576 = vmatpush1.msra.mxu0 0.0
    %577 = vmatprep.subr.mxu0 0.0
    %578 = vmatpush1.msra.mxu0 0.0
    %579 = vmatprep.subr.mxu0 0.0
    %580 = vmatpush1.msra.mxu0 0.0
    %581 = vmatprep.subr.mxu0 0.0
    %582 = vmatpush1.msra.mxu0 0.0
    %583 = vmatprep.subr.mxu0 0.0
    %584 = vmatpush1.msra.mxu0 0.0
    %585 = vmatprep.subr.mxu0 0.0
    %586 = vmatpush1.msra.mxu0 0.0
    %587 = vmatprep.subr.mxu0 0.0
    %588 = vmatpush1.msra.mxu0 0.0
    %589 = vmatprep.mubr.f32.mxu0 0.0
    %590 = vmatmul.mubr.f32.gmra.mrb[0].mxu0 %v375
    %v591 = vpop.f32.mrb[0].mxu0
    %v592 = vadd.f32 %v493, %v591
    %v593 = vpop.f32.mrb[0].mxu0
    %v594 = vadd.f32 %v497, %v593
    %595 = vdwg.mxu0
    %596 = vmatprep.subr.mxu0 %v379
    %597 = vmatpush1.msra.mxu0 %v378
    %598 = vmatprep.subr.mxu0 %v386
    %599 = vmatpush1.msra.mxu0 %v385
    %600 = vmatprep.subr.mxu0 %v393
    %601 = vmatpush1.msra.mxu0 %v392
    %602 = vmatprep.subr.mxu0 %v400
    %603 = vmatpush1.msra.mxu0 %v399
    %604 = vmatprep.subr.mxu0 %v407
    %605 = vmatpush1.msra.mxu0 %v406
    %606 = vmatprep.subr.mxu0 %v414
    %607 = vmatpush1.msra.mxu0 %v413
    %608 = vmatprep.subr.mxu0 %v421
    %609 = vmatpush1.msra.mxu0 %v420
    %610 = vmatprep.subr.mxu0 %v428
    %611 = vmatpush1.msra.mxu0 %v427
    %612 = vmatprep.subr.mxu0 %v435
    %613 = vmatpush1.msra.mxu0 %v434
    %614 = vmatprep.subr.mxu0 %v442
    %615 = vmatpush1.msra.mxu0 %v441
    %616 = vmatprep.subr.mxu0 %v449
    %617 = vmatpush1.msra.mxu0 %v448
    %618 = vmatprep.subr.mxu0 %v456
    %619 = vmatpush1.msra.mxu0 %v455
    %620 = vmatprep.subr.mxu0 %v463
    %621 = vmatpush1.msra.mxu0 %v462
    %622 = vmatprep.subr.mxu0 %v470
    %623 = vmatpush1.msra.mxu0 %v469
    %624 = vmatprep.subr.mxu0 %v477
    %625 = vmatpush1.msra.mxu0 %v476
    %626 = vmatprep.subr.mxu0 %v484
    %627 = vmatpush1.msra.mxu0 %v483
    %628 = vmatprep.subr.mxu0 0.0
    %629 = vmatpush1.msra.mxu0 0.0
    %630 = vmatprep.subr.mxu0 0.0
    %631 = vmatpush1.msra.mxu0 0.0
    %632 = vmatprep.subr.mxu0 0.0
    %633 = vmatpush1.msra.mxu0 0.0
    %634 = vmatprep.subr.mxu0 0.0
    %635 = vmatpush1.msra.mxu0 0.0
    %636 = vmatprep.subr.mxu0 0.0
    %637 = vmatpush1.msra.mxu0 0.0
    %638 = vmatprep.subr.mxu0 0.0
    %639 = vmatpush1.msra.mxu0 0.0
    %640 = vmatprep.subr.mxu0 0.0
    %641 = vmatpush1.msra.mxu0 0.0
    %642 = vmatprep.subr.mxu0 0.0
    %643 = vmatpush1.msra.mxu0 0.0
    %644 = vmatprep.subr.mxu0 0.0
    %645 = vmatpush1.msra.mxu0 0.0
    %646 = vmatprep.subr.mxu0 0.0
    %647 = vmatpush1.msra.mxu0 0.0
    %648 = vmatprep.subr.mxu0 0.0
    %649 = vmatpush1.msra.mxu0 0.0
    %650 = vmatprep.subr.mxu0 0.0
    %651 = vmatpush1.msra.mxu0 0.0
    %652 = vmatprep.subr.mxu0 0.0
    %653 = vmatpush1.msra.mxu0 0.0
    %654 = vmatprep.subr.mxu0 0.0
    %655 = vmatpush1.msra.mxu0 0.0
    %656 = vmatprep.subr.mxu0 0.0
    %657 = vmatpush1.msra.mxu0 0.0
    %658 = vmatprep.subr.mxu0 0.0
    %659 = vmatpush1.msra.mxu0 0.0
    %660 = vmatprep.mubr.f32.mxu0 0.0
    %661 = vmatmul.mubr.f32.gmra.mrb[0].mxu0 %v375
    %v662 = vpop.f32.mrb[0].mxu0
    %v663 = vadd.f32 %v501, %v662
    %v664 = vpop.f32.mrb[0].mxu0
    %v665 = vadd.f32 %v505, %v664
    %666 = vdwg.mxu0
    %667 = vmatprep.subr.mxu0 %v381
    %668 = vmatpush1.msra.mxu0 %v380
    %669 = vmatprep.subr.mxu0 %v388
    %670 = vmatpush1.msra.mxu0 %v387
    %671 = vmatprep.subr.mxu0 %v395
    %672 = vmatpush1.msra.mxu0 %v394
    %673 = vmatprep.subr.mxu0 %v402
    %674 = vmatpush1.msra.mxu0 %v401
    %675 = vmatprep.subr.mxu0 %v409
    %676 = vmatpush1.msra.mxu0 %v408
    %677 = vmatprep.subr.mxu0 %v416
    %678 = vmatpush1.msra.mxu0 %v415
    %679 = vmatprep.subr.mxu0 %v423
    %680 = vmatpush1.msra.mxu0 %v422
    %681 = vmatprep.subr.mxu0 %v430
    %682 = vmatpush1.msra.mxu0 %v429
    %683 = vmatprep.subr.mxu0 %v437
    %684 = vmatpush1.msra.mxu0 %v436
    %685 = vmatprep.subr.mxu0 %v444
    %686 = vmatpush1.msra.mxu0 %v443
    %687 = vmatprep.subr.mxu0 %v451
    %688 = vmatpush1.msra.mxu0 %v450
    %689 = vmatprep.subr.mxu0 %v458
    %690 = vmatpush1.msra.mxu0 %v457
    %691 = vmatprep.subr.mxu0 %v465
    %692 = vmatpush1.msra.mxu0 %v464
    %693 = vmatprep.subr.mxu0 %v472
    %694 = vmatpush1.msra.mxu0 %v471
    %695 = vmatprep.subr.mxu0 %v479
    %696 = vmatpush1.msra.mxu0 %v478
    %697 = vmatprep.subr.mxu0 %v486
    %698 = vmatpush1.msra.mxu0 %v485
    %699 = vmatprep.subr.mxu0 0.0
    %700 = vmatpush1.msra.mxu0 0.0
    %701 = vmatprep.subr.mxu0 0.0
    %702 = vmatpush1.msra.mxu0 0.0
    %703 = vmatprep.subr.mxu0 0.0
    %704 = vmatpush1.msra.mxu0 0.0
    %705 = vmatprep.subr.mxu0 0.0
    %706 = vmatpush1.msra.mxu0 0.0
    %707 = vmatprep.subr.mxu0 0.0
    %708 = vmatpush1.msra.mxu0 0.0
    %709 = vmatprep.subr.mxu0 0.0
    %710 = vmatpush1.msra.mxu0 0.0
    %711 = vmatprep.subr.mxu0 0.0
    %712 = vmatpush1.msra.mxu0 0.0
    %713 = vmatprep.subr.mxu0 0.0
    %714 = vmatpush1.msra.mxu0 0.0
    %715 = vmatprep.subr.mxu0 0.0
    %716 = vmatpush1.msra.mxu0 0.0
    %717 = vmatprep.subr.mxu0 0.0
    %718 = vmatpush1.msra.mxu0 0.0
    %719 = vmatprep.subr.mxu0 0.0
    %720 = vmatpush1.msra.mxu0 0.0
    %721 = vmatprep.subr.mxu0 0.0
    %722 = vmatpush1.msra.mxu0 0.0
    %723 = vmatprep.subr.mxu0 0.0
    %724 = vmatpush1.msra.mxu0 0.0
    %725 = vmatprep.subr.mxu0 0.0
    %726 = vmatpush1.msra.mxu0 0.0
    %727 = vmatprep.subr.mxu0 0.0
    %728 = vmatpush1.msra.mxu0 0.0
    %729 = vmatprep.subr.mxu0 0.0
    %730 = vmatpush1.msra.mxu0 0.0
    %731 = vmatprep.mubr.f32.mxu0 0.0
    %732 = vmatmul.mubr.f32.gmra.mrb[0].mxu0 %v375
    %v733 = vpop.f32.mrb[0].mxu0
    %v734 = vadd.f32 %v509, %v733
    %v735 = vpop.f32.mrb[0].mxu0
    %v736 = vadd.f32 %v513, %v735
    %737 = vdwg.mxu0
    %738 = vmatprep.subr.mxu0 0.0
    %739 = vmatpush1.msra.mxu0 %v382
    %740 = vmatprep.subr.mxu0 0.0
    %741 = vmatpush1.msra.mxu0 %v389
    %742 = vmatprep.subr.mxu0 0.0
    %743 = vmatpush1.msra.mxu0 %v396
    %744 = vmatprep.subr.mxu0 0.0
    %745 = vmatpush1.msra.mxu0 %v403
    %746 = vmatprep.subr.mxu0 0.0
    %747 = vmatpush1.msra.mxu0 %v410
    %748 = vmatprep.subr.mxu0 0.0
    %749 = vmatpush1.msra.mxu0 %v417
    %750 = vmatprep.subr.mxu0 0.0
    %751 = vmatpush1.msra.mxu0 %v424
    %752 = vmatprep.subr.mxu0 0.0
    %753 = vmatpush1.msra.mxu0 %v431
    %754 = vmatprep.subr.mxu0 0.0
    %755 = vmatpush1.msra.mxu0 %v438
    %756 = vmatprep.subr.mxu0 0.0
    %757 = vmatpush1.msra.mxu0 %v445
    %758 = vmatprep.subr.mxu0 0.0
    %759 = vmatpush1.msra.mxu0 %v452
    %760 = vmatprep.subr.mxu0 0.0
    %761 = vmatpush1.msra.mxu0 %v459
    %762 = vmatprep.subr.mxu0 0.0
    %763 = vmatpush1.msra.mxu0 %v466
    %764 = vmatprep.subr.mxu0 0.0
    %765 = vmatpush1.msra.mxu0 %v473
    %766 = vmatprep.subr.mxu0 0.0
    %767 = vmatpush1.msra.mxu0 %v480
    %768 = vmatprep.subr.mxu0 0.0
    %769 = vmatpush1.msra.mxu0 %v487
    %770 = vmatprep.subr.mxu0 0.0
    %771 = vmatpush1.msra.mxu0 0.0
    %772 = vmatprep.subr.mxu0 0.0
    %773 = vmatpush1.msra.mxu0 0.0
    %774 = vmatprep.subr.mxu0 0.0
    %775 = vmatpush1.msra.mxu0 0.0
    %776 = vmatprep.subr.mxu0 0.0
    %777 = vmatpush1.msra.mxu0 0.0
    %778 = vmatprep.subr.mxu0 0.0
    %779 = vmatpush1.msra.mxu0 0.0
    %780 = vmatprep.subr.mxu0 0.0
    %781 = vmatpush1.msra.mxu0 0.0
    %782 = vmatprep.subr.mxu0 0.0
    %783 = vmatpush1.msra.mxu0 0.0
    %784 = vmatprep.subr.mxu0 0.0
    %785 = vmatpush1.msra.mxu0 0.0
    %786 = vmatprep.subr.mxu0 0.0
    %787 = vmatpush1.msra.mxu0 0.0
    %788 = vmatprep.subr.mxu0 0.0
    %789 = vmatpush1.msra.mxu0 0.0
    %790 = vmatprep.subr.mxu0 0.0
    %791 = vmatpush1.msra.mxu0 0.0
    %792 = vmatprep.subr.mxu0 0.0
    %793 = vmatpush1.msra.mxu0 0.0
    %794 = vmatprep.subr.mxu0 0.0
    %795 = vmatpush1.msra.mxu0 0.0
    %796 = vmatprep.subr.mxu0 0.0
    %797 = vmatpush1.msra.mxu0 0.0
    %798 = vmatprep.subr.mxu0 0.0
    %799 = vmatpush1.msra.mxu0 0.0
    %800 = vmatprep.subr.mxu0 0.0
    %801 = vmatpush1.msra.mxu0 0.0
    %802 = vmatprep.mubr.f32.mxu0 0.0
    %803 = vmatmul.mubr.f32.gmra.mrb[0].mxu0 %v375
    %v804 = vpop.f32.mrb[0].mxu0
    %v805 = vadd.f32 %v517, %v804
    %v806 = vpop.f32.mrb[0].mxu0
    %807 = vdwg.mxu0
    %v808 = vtanh.pop %v592
    %v809 = vtanh.pop %v594
    %v810 = vtanh.pop %v663
    %v811 = vtanh.pop %v665
    %v812 = vtanh.pop %v734
    %v813 = vtanh.pop %v736
    %v814 = vtanh.pop %v805
    %815 = vst [vmem:[%s9] sm:$0xff] %v808
    %816 = vst [vmem:[%s9 + $0x8] sm:$0xff] %v809
    %817 = vst [vmem:[%s9 + $0x10] sm:$0xff] %v810
    %818 = vst [vmem:[%s9 + $0x18] sm:$0xff] %v811
    %819 = vst [vmem:[%s9 + $0x20] sm:$0xff] %v812
    %820 = vst [vmem:[%s9 + $0x28] sm:$0xff] %v813
    %821 = vst [vmem:[%s9 + $0x30] sm:$0xff] %v814
    // Predicated region
    $region54: #{generator_forward.1} parent=1 // pred_check
      _
    $region55: #{generator_forward.1} parent=1 // pred_check_branch
      %823 = sbr.rel (0) target = $region57
    $region56: #{generator_forward.1} parent=1 // pred_region
      _
    $region57: #{generator_forward.1} parent=1 // pred_fallthru
      _
    // Predicated region
    $region58: #{generator_forward.1} parent=1 // pred_check
      _
    $region59: #{generator_forward.1} parent=1 // pred_check_branch
      %825 = sbr.rel (0) target = $region61
    $region60: #{generator_forward.1} parent=1 // pred_region
      _
    $region61: #{generator_forward.1} parent=1 // pred_fallthru
      _
    %826 = vsyncpa [#allocation3], 1
    %827 = vsyncpa [#allocation5], 1
    %828 = vsyncpa [#allocation8], 1

// kernel: generator_forward.1
$region0: #{generator_forward.1}
  #allocation0 [shape = 'u32[]', space=smem, size = 0x4, offset = 0x4, fixed_abs, tag = 'smem constant byte address 0x4 - core index']
  #allocation1 [shape = 'u32[144,128]{1,0:T(1,128)}', space=vmem, size = 0x12000, scoped, tag = 'internal scratch']
  %s0 = inlined_call_operand.vmem [shape: f32[8,128], index: 0, kind: input, shape index: {}]
  %s1 = inlined_call_operand.hbm [shape: f32[128,128], index: 1, kind: input, shape index: {}]
  %s2 = inlined_call_operand.vmem [shape: f32[1,128], index: 2, kind: input, shape index: {}]
  %s3 = inlined_call_operand.hbm [shape: f32[128,128], index: 3, kind: input, shape index: {}]
  %s4 = inlined_call_operand.vmem [shape: f32[1,128], index: 4, kind: input, shape index: {}]
  %s5 = inlined_call_operand.hbm [shape: f32[128,128], index: 5, kind: input, shape index: {}]
  %s6 = inlined_call_operand.vmem [shape: f32[1,128], index: 6, kind: input, shape index: {}]
  %s7 = inlined_call_operand.hbm [shape: f32[128,896], index: 7, kind: input, shape index: {}]
  %s8 = inlined_call_operand.vmem [shape: f32[1,896], index: 8, kind: input, shape index: {}]
  %s9 = inlined_call_operand.vmem [shape: f32[8,896], index: 9, kind: output, shape index: {}]
  %s10 = sld [smem:[#allocation0]]
  $region62: #{generator_forward.1} parent=0
    _
  %s12 = ssub.s32 1, %s10
  %s13 = scalar_select 0, %s12, %s10
  $region1: #{generator_forward.1} parent=0
    #allocation2 [shape = 'u8[65536]{0}', space=vmem, size = 0x10000, scoped, tag = 'input window, operand 1, single buffered']
    #allocation3 [shape = 's32[1]{0}', space=sflag, size = 0x4, scoped, tag = 'scoped memory for generator_forward.1']
    #allocation4 [shape = 'u8[65536]{0}', space=vmem, size = 0x10000, scoped, tag = 'input window, operand 3, single buffered']
    #allocation5 [shape = 's32[1]{0}', space=sflag, size = 0x4, scoped, tag = 'scoped memory for generator_forward.1']
    #allocation6 [shape = 'u8[65536]{0}', space=vmem, size = 0x10000, scoped, tag = 'input window, operand 5, single buffered']
    #allocation7 [shape = 'u8[458752]{0}', space=vmem, size = 0x70000, scoped, tag = 'input window, operand 7, single buffered']
    #allocation8 [shape = 's32[1]{0}', space=sflag, size = 0x4, scoped, tag = 'scoped memory for generator_forward.1']
    %14 = vsyncpa [#allocation3], 0
    %15 = vsyncpa [#allocation5], 0
    %16 = vsyncpa [#allocation8], 0
    // Predicated region
    $region2: #{generator_forward.1} parent=1 // pred_check
      _
    $region3: #{generator_forward.1} parent=1 // pred_check_branch
      %18 = sbr.rel (0) target = $region5
    $region4: #{generator_forward.1} parent=1 // pred_region
      _
    $region5: #{generator_forward.1} parent=1 // pred_fallthru
      _
    // Predicated region
    $region6: #{generator_forward.1} parent=1 // pred_check
      _
    $region7: #{generator_forward.1} parent=1 // pred_check_branch
      %20 = sbr.rel (0) target = $region9
    $region8: #{generator_forward.1} parent=1 // pred_region
      %s22 = ssub.s32 2048, 2048
      %23 = vsyncadd [#allocation3], %s22
      %s24 = sshll.u32 [#allocation2], 4
      %s25 = int_to_ptr.vmem [resolvable:$true] %s24
      %30 = dma.hbm_to_vmem [thread:$0]  %s1, 2048, %s25, [#allocation3], 128, 128, 8
    $region9: #{generator_forward.1} parent=1 // pred_fallthru
      _
    // Predicated region
    $region10: #{generator_forward.1} parent=1 // pred_check
      _
    $region11: #{generator_forward.1} parent=1 // pred_check_branch
      %32 = sbr.rel (0) target = $region13
    $region12: #{generator_forward.1} parent=1 // pred_region
      _
    $region13: #{generator_forward.1} parent=1 // pred_fallthru
      _
    // Predicated region
    $region14: #{generator_forward.1} parent=1 // pred_check
      _
    $region15: #{generator_forward.1} parent=1 // pred_check_branch
      %34 = sbr.rel (0) target = $region17
    $region16: #{generator_forward.1} parent=1 // pred_region
      %s36 = ssub.s32 2048, 2048
      %37 = vsyncadd [#allocation5], %s36
      %s38 = sshll.u32 [#allocation4], 4
      %s39 = int_to_ptr.vmem [resolvable:$true] %s38
      %44 = dma.hbm_to_vmem [thread:$0]  %s3, 2048, %s39, [#allocation5], 128, 128, 8
    $region17: #{generator_forward.1} parent=1 // pred_fallthru
      _
    // Predicated region
    $region18: #{generator_forward.1} parent=1 // pred_check
      _
    $region19: #{generator_forward.1} parent=1 // pred_check_branch
      %46 = sbr.rel (0) target = $region21
    $region20: #{generator_forward.1} parent=1 // pred_region
      _
    $region21: #{generator_forward.1} parent=1 // pred_fallthru
      _
    // Predicated region
    $region22: #{generator_forward.1} parent=1 // pred_check
      _
    $region23: #{generator_forward.1} parent=1 // pred_check_branch
      %48 = sbr.rel (0) target = $region25
    $region24: #{generator_forward.1} parent=1 // pred_region
      %s50 = ssub.s32 2048, 2048
      %51 = vsyncadd [#allocation5], %s50
      %s52 = sshll.u32 [#allocation6], 4
      %s53 = int_to_ptr.vmem [resolvable:$true] %s52
      %58 = dma.hbm_to_vmem [thread:$0]  %s5, 2048, %s53, [#allocation5], 128, 128, 8
    $region25: #{generator_forward.1} parent=1 // pred_fallthru
      _
    // Predicated region
    $region26: #{generator_forward.1} parent=1 // pred_check
      _
    $region27: #{generator_forward.1} parent=1 // pred_check_branch
      %60 = sbr.rel (0) target = $region29
    $region28: #{generator_forward.1} parent=1 // pred_region
      _
    $region29: #{generator_forward.1} parent=1 // pred_fallthru
      _
    // Predicated region
    $region30: #{generator_forward.1} parent=1 // pred_check
      _
    $region31: #{generator_forward.1} parent=1 // pred_check_branch
      %62 = sbr.rel (0) target = $region33
    $region32: #{generator_forward.1} parent=1 // pred_region
      %s64 = ssub.s32 14336, 14336
      %65 = vsyncadd [#allocation8], %s64
      %s66 = sshll.u32 [#allocation7], 4
      %s67 = int_to_ptr.vmem [resolvable:$true] %s66
      %72 = dma.hbm_to_vmem [thread:$0]  %s7, 14336, %s67, [#allocation8], 896, 896, 56
    $region33: #{generator_forward.1} parent=1 // pred_fallthru
      _
    // Predicated region
    $region34: #{generator_forward.1} parent=1 // pred_check
      _
    $region35: #{generator_forward.1} parent=1 // pred_check_branch
      %74 = sbr.rel (0) target = $region37
    $region36: #{generator_forward.1} parent=1 // pred_region
      _
    $region37: #{generator_forward.1} parent=1 // pred_fallthru
      _
    // Predicated region
    $region38: #{generator_forward.1} parent=1 // pred_check
      _
    $region39: #{generator_forward.1} parent=1 // pred_check_branch
      %76 = sbr.rel (0) target = $region41
    $region40: #{generator_forward.1} parent=1 // pred_region
      %77 = dma.done [#allocation3], 2048
    $region41: #{generator_forward.1} parent=1 // pred_fallthru
      _
    // Predicated region
    $region42: #{generator_forward.1} parent=1 // pred_check
      _
    $region43: #{generator_forward.1} parent=1 // pred_check_branch
      %79 = sbr.rel (0) target = $region45
    $region44: #{generator_forward.1} parent=1 // pred_region
      %80 = dma.done [#allocation5], 2048
    $region45: #{generator_forward.1} parent=1 // pred_fallthru
      _
    // Predicated region
    $region46: #{generator_forward.1} parent=1 // pred_check
      _
    $region47: #{generator_forward.1} parent=1 // pred_check_branch
      %82 = sbr.rel (0) target = $region49
    $region48: #{generator_forward.1} parent=1 // pred_region
      %83 = dma.done [#allocation5], 2048
    $region49: #{generator_forward.1} parent=1 // pred_fallthru
      _
    // Predicated region
    $region50: #{generator_forward.1} parent=1 // pred_check
      _
    $region51: #{generator_forward.1} parent=1 // pred_check_branch
      %85 = sbr.rel (0) target = $region53
    $region52: #{generator_forward.1} parent=1 // pred_region
      %86 = dma.done [#allocation8], 14336
    $region53: #{generator_forward.1} parent=1 // pred_fallthru
      _
    %v87 = vld [vmem:[%s0] sm:$0xff]
    %v88 = vld [vmem:[#allocation2] sm:$0xff]
    %v89 = vld [vmem:[#allocation2 + $0x8] sm:$0xff]
    %v90 = vld [vmem:[#allocation2 + $0x10] sm:$0xff]
    %v91 = vld [vmem:[#allocation2 + $0x18] sm:$0xff]
    %v92 = vld [vmem:[#allocation2 + $0x20] sm:$0xff]
    %v93 = vld [vmem:[#allocation2 + $0x28] sm:$0xff]
    %v94 = vld [vmem:[#allocation2 + $0x30] sm:$0xff]
    %v95 = vld [vmem:[#allocation2 + $0x38] sm:$0xff]
    %v96 = vld [vmem:[#allocation2 + $0x40] sm:$0xff]
    %v97 = vld [vmem:[#allocation2 + $0x48] sm:$0xff]
    %v98 = vld [vmem:[#allocation2 + $0x50] sm:$0xff]
    %v99 = vld [vmem:[#allocation2 + $0x58] sm:$0xff]
    %v100 = vld [vmem:[#allocation2 + $0x60] sm:$0xff]
    %v101 = vld [vmem:[#allocation2 + $0x68] sm:$0xff]
    %v102 = vld [vmem:[#allocation2 + $0x70] sm:$0xff]
    %v103 = vld [vmem:[#allocation2 + $0x78] sm:$0xff]
    %v104 = vld [vmem:[%s2] sm:$0x1]
    %v106 = vlaneseq
    %v107 = vshrl.u32 %v106, 7
    %v108 = vsub.s32 0, %v107
    %v109 = vrot.slane %v104, %v108
    %111 = vmatprep.subr.mxu0 0.0
    %112 = vmatpush1.msra.mxu0 %v88
    %113 = vmatprep.subr.mxu0 0.0
    %114 = vmatpush1.msra.mxu0 %v89
    %115 = vmatprep.subr.mxu0 0.0
    %116 = vmatpush1.msra.mxu0 %v90
    %117 = vmatprep.subr.mxu0 0.0
    %118 = vmatpush1.msra.mxu0 %v91
    %119 = vmatprep.subr.mxu0 0.0
    %120 = vmatpush1.msra.mxu0 %v92
    %121 = vmatprep.subr.mxu0 0.0
    %122 = vmatpush1.msra.mxu0 %v93
    %123 = vmatprep.subr.mxu0 0.0
    %124 = vmatpush1.msra.mxu0 %v94
    %125 = vmatprep.subr.mxu0 0.0
    %126 = vmatpush1.msra.mxu0 %v95
    %127 = vmatprep.subr.mxu0 0.0
    %128 = vmatpush1.msra.mxu0 %v96
    %129 = vmatprep.subr.mxu0 0.0
    %130 = vmatpush1.msra.mxu0 %v97
    %131 = vmatprep.subr.mxu0 0.0
    %132 = vmatpush1.msra.mxu0 %v98
    %133 = vmatprep.subr.mxu0 0.0
    %134 = vmatpush1.msra.mxu0 %v99
    %135 = vmatprep.subr.mxu0 0.0
    %136 = vmatpush1.msra.mxu0 %v100
    %137 = vmatprep.subr.mxu0 0.0
    %138 = vmatpush1.msra.mxu0 %v101
    %139 = vmatprep.subr.mxu0 0.0
    %140 = vmatpush1.msra.mxu0 %v102
    %141 = vmatprep.subr.mxu0 0.0
    %142 = vmatpush1.msra.mxu0 %v103
    %143 = vmatprep.subr.mxu0 0.0
    %144 = vmatpush1.msra.mxu0 0.0
    %145 = vmatprep.subr.mxu0 0.0
    %146 = vmatpush1.msra.mxu0 0.0
    %147 = vmatprep.subr.mxu0 0.0
    %148 = vmatpush1.msra.mxu0 0.0
    %149 = vmatprep.subr.mxu0 0.0
    %150 = vmatpush1.msra.mxu0 0.0
    %151 = vmatprep.subr.mxu0 0.0
    %152 = vmatpush1.msra.mxu0 0.0
    %153 = vmatprep.subr.mxu0 0.0
    %154 = vmatpush1.msra.mxu0 0.0
    %155 = vmatprep.subr.mxu0 0.0
    %156 = vmatpush1.msra.mxu0 0.0
    %157 = vmatprep.subr.mxu0 0.0
    %158 = vmatpush1.msra.mxu0 0.0
    %159 = vmatprep.subr.mxu0 0.0
    %160 = vmatpush1.msra.mxu0 0.0
    %161 = vmatprep.subr.mxu0 0.0
    %162 = vmatpush1.msra.mxu0 0.0
    %163 = vmatprep.subr.mxu0 0.0
    %164 = vmatpush1.msra.mxu0 0.0
    %165 = vmatprep.subr.mxu0 0.0
    %166 = vmatpush1.msra.mxu0 0.0
    %167 = vmatprep.subr.mxu0 0.0
    %168 = vmatpush1.msra.mxu0 0.0
    %169 = vmatprep.subr.mxu0 0.0
    %170 = vmatpush1.msra.mxu0 0.0
    %171 = vmatprep.subr.mxu0 0.0
    %172 = vmatpush1.msra.mxu0 0.0
    %173 = vmatprep.subr.mxu0 0.0
    %174 = vmatpush1.msra.mxu0 0.0
    %175 = vmatprep.mubr.f32.mxu0 0.0
    %176 = vmatmul.mubr.f32.gmra.mrb[0].mxu0 %v87
    %v177 = vpop.f32.mrb[0].mxu0
    %v178 = vadd.f32 %v109, %v177
    %v179 = vpop.f32.mrb[0].mxu0
    %180 = vdwg.mxu0
    %vm181 = vcmp.gt.f32.partialorder %v178, 0.0
    %v182 = vmul.f32 %v178, 0.2
    %v183 = vsel %vm181, %v178, %v182
    %v184 = vld [vmem:[#allocation4] sm:$0xff]
    %v185 = vld [vmem:[#allocation4 + $0x8] sm:$0xff]
    %v186 = vld [vmem:[#allocation4 + $0x10] sm:$0xff]
    %v187 = vld [vmem:[#allocation4 + $0x18] sm:$0xff]
    %v188 = vld [vmem:[#allocation4 + $0x20] sm:$0xff]
    %v189 = vld [vmem:[#allocation4 + $0x28] sm:$0xff]
    %v190 = vld [vmem:[#allocation4 + $0x30] sm:$0xff]
    %v191 = vld [vmem:[#allocation4 + $0x38] sm:$0xff]
    %v192 = vld [vmem:[#allocation4 + $0x40] sm:$0xff]
    %v193 = vld [vmem:[#allocation4 + $0x48] sm:$0xff]
    %v194 = vld [vmem:[#allocation4 + $0x50] sm:$0xff]
    %v195 = vld [vmem:[#allocation4 + $0x58] sm:$0xff]
    %v196 = vld [vmem:[#allocation4 + $0x60] sm:$0xff]
    %v197 = vld [vmem:[#allocation4 + $0x68] sm:$0xff]
    %v198 = vld [vmem:[#allocation4 + $0x70] sm:$0xff]
    %v199 = vld [vmem:[#allocation4 + $0x78] sm:$0xff]
    %v200 = vld [vmem:[%s4] sm:$0x1]
    %v202 = vlaneseq
    %v203 = vshrl.u32 %v202, 7
    %v204 = vsub.s32 0, %v203
    %v205 = vrot.slane %v200, %v204
    %207 = vmatprep.subr.mxu0 0.0
    %208 = vmatpush1.msra.mxu0 %v184
    %209 = vmatprep.subr.mxu0 0.0
    %210 = vmatpush1.msra.mxu0 %v185
    %211 = vmatprep.subr.mxu0 0.0
    %212 = vmatpush1.msra.mxu0 %v186
    %213 = vmatprep.subr.mxu0 0.0
    %214 = vmatpush1.msra.mxu0 %v187
    %215 = vmatprep.subr.mxu0 0.0
    %216 = vmatpush1.msra.mxu0 %v188
    %217 = vmatprep.subr.mxu0 0.0
    %218 = vmatpush1.msra.mxu0 %v189
    %219 = vmatprep.subr.mxu0 0.0
    %220 = vmatpush1.msra.mxu0 %v190
    %221 = vmatprep.subr.mxu0 0.0
    %222 = vmatpush1.msra.mxu0 %v191
    %223 = vmatprep.subr.mxu0 0.0
    %224 = vmatpush1.msra.mxu0 %v192
    %225 = vmatprep.subr.mxu0 0.0
    %226 = vmatpush1.msra.mxu0 %v193
    %227 = vmatprep.subr.mxu0 0.0
    %228 = vmatpush1.msra.mxu0 %v194
    %229 = vmatprep.subr.mxu0 0.0
    %230 = vmatpush1.msra.mxu0 %v195
    %231 = vmatprep.subr.mxu0 0.0
    %232 = vmatpush1.msra.mxu0 %v196
    %233 = vmatprep.subr.mxu0 0.0
    %234 = vmatpush1.msra.mxu0 %v197
    %235 = vmatprep.subr.mxu0 0.0
    %236 = vmatpush1.msra.mxu0 %v198
    %237 = vmatprep.subr.mxu0 0.0
    %238 = vmatpush1.msra.mxu0 %v199
    %239 = vmatprep.subr.mxu0 0.0
    %240 = vmatpush1.msra.mxu0 0.0
    %241 = vmatprep.subr.mxu0 0.0
    %242 = vmatpush1.msra.mxu0 0.0
    %243 = vmatprep.subr.mxu0 0.0
    %244 = vmatpush1.msra.mxu0 0.0
    %245 = vmatprep.subr.mxu0 0.0
    %246 = vmatpush1.msra.mxu0 0.0
    %247 = vmatprep.subr.mxu0 0.0
    %248 = vmatpush1.msra.mxu0 0.0
    %249 = vmatprep.subr.mxu0 0.0
    %250 = vmatpush1.msra.mxu0 0.0
    %251 = vmatprep.subr.mxu0 0.0
    %252 = vmatpush1.msra.mxu0 0.0
    %253 = vmatprep.subr.mxu0 0.0
    %254 = vmatpush1.msra.mxu0 0.0
    %255 = vmatprep.subr.mxu0 0.0
    %256 = vmatpush1.msra.mxu0 0.0
    %257 = vmatprep.subr.mxu0 0.0
    %258 = vmatpush1.msra.mxu0 0.0
    %259 = vmatprep.subr.mxu0 0.0
    %260 = vmatpush1.msra.mxu0 0.0
    %261 = vmatprep.subr.mxu0 0.0
    %262 = vmatpush1.msra.mxu0 0.0
    %263 = vmatprep.subr.mxu0 0.0
    %264 = vmatpush1.msra.mxu0 0.0
    %265 = vmatprep.subr.mxu0 0.0
    %266 = vmatpush1.msra.mxu0 0.0
    %267 = vmatprep.subr.mxu0 0.0
    %268 = vmatpush1.msra.mxu0 0.0
    %269 = vmatprep.subr.mxu0 0.0
    %270 = vmatpush1.msra.mxu0 0.0
    %271 = vmatprep.mubr.f32.mxu0 0.0
    %272 = vmatmul.mubr.f32.gmra.mrb[0].mxu0 %v183
    %v273 = vpop.f32.mrb[0].mxu0
    %v274 = vadd.f32 %v205, %v273
    %v275 = vpop.f32.mrb[0].mxu0
    %276 = vdwg.mxu0
    %vm277 = vcmp.gt.f32.partialorder %v274, 0.0
    %v278 = vmul.f32 %v274, 0.2
    %v279 = vsel %vm277, %v274, %v278
    %v280 = vld [vmem:[#allocation6] sm:$0xff]
    %v281 = vld [vmem:[#allocation6 + $0x8] sm:$0xff]
    %v282 = vld [vmem:[#allocation6 + $0x10] sm:$0xff]
    %v283 = vld [vmem:[#allocation6 + $0x18] sm:$0xff]
    %v284 = vld [vmem:[#allocation6 + $0x20] sm:$0xff]
    %v285 = vld [vmem:[#allocation6 + $0x28] sm:$0xff]
    %v286 = vld [vmem:[#allocation6 + $0x30] sm:$0xff]
    %v287 = vld [vmem:[#allocation6 + $0x38] sm:$0xff]
    %v288 = vld [vmem:[#allocation6 + $0x40] sm:$0xff]
    %v289 = vld [vmem:[#allocation6 + $0x48] sm:$0xff]
    %v290 = vld [vmem:[#allocation6 + $0x50] sm:$0xff]
    %v291 = vld [vmem:[#allocation6 + $0x58] sm:$0xff]
    %v292 = vld [vmem:[#allocation6 + $0x60] sm:$0xff]
    %v293 = vld [vmem:[#allocation6 + $0x68] sm:$0xff]
    %v294 = vld [vmem:[#allocation6 + $0x70] sm:$0xff]
    %v295 = vld [vmem:[#allocation6 + $0x78] sm:$0xff]
    %v296 = vld [vmem:[%s6] sm:$0x1]
    %v298 = vlaneseq
    %v299 = vshrl.u32 %v298, 7
    %v300 = vsub.s32 0, %v299
    %v301 = vrot.slane %v296, %v300
    %303 = vmatprep.subr.mxu0 0.0
    %304 = vmatpush1.msra.mxu0 %v280
    %305 = vmatprep.subr.mxu0 0.0
    %306 = vmatpush1.msra.mxu0 %v281
    %307 = vmatprep.subr.mxu0 0.0
    %308 = vmatpush1.msra.mxu0 %v282
    %309 = vmatprep.subr.mxu0 0.0
    %310 = vmatpush1.msra.mxu0 %v283
    %311 = vmatprep.subr.mxu0 0.0
    %312 = vmatpush1.msra.mxu0 %v284
    %313 = vmatprep.subr.mxu0 0.0
    %314 = vmatpush1.msra.mxu0 %v285
    %315 = vmatprep.subr.mxu0 0.0
    %316 = vmatpush1.msra.mxu0 %v286
    %317 = vmatprep.subr.mxu0 0.0
    %318 = vmatpush1.msra.mxu0 %v287
    %319 = vmatprep.subr.mxu0 0.0
    %320 = vmatpush1.msra.mxu0 %v288
    %321 = vmatprep.subr.mxu0 0.0
    %322 = vmatpush1.msra.mxu0 %v289
    %323 = vmatprep.subr.mxu0 0.0
    %324 = vmatpush1.msra.mxu0 %v290
    %325 = vmatprep.subr.mxu0 0.0
    %326 = vmatpush1.msra.mxu0 %v291
    %327 = vmatprep.subr.mxu0 0.0
    %328 = vmatpush1.msra.mxu0 %v292
    %329 = vmatprep.subr.mxu0 0.0
    %330 = vmatpush1.msra.mxu0 %v293
    %331 = vmatprep.subr.mxu0 0.0
    %332 = vmatpush1.msra.mxu0 %v294
    %333 = vmatprep.subr.mxu0 0.0
    %334 = vmatpush1.msra.mxu0 %v295
    %335 = vmatprep.subr.mxu0 0.0
    %336 = vmatpush1.msra.mxu0 0.0
    %337 = vmatprep.subr.mxu0 0.0
    %338 = vmatpush1.msra.mxu0 0.0
    %339 = vmatprep.subr.mxu0 0.0
    %340 = vmatpush1.msra.mxu0 0.0
    %341 = vmatprep.subr.mxu0 0.0
    %342 = vmatpush1.msra.mxu0 0.0
    %343 = vmatprep.subr.mxu0 0.0
    %344 = vmatpush1.msra.mxu0 0.0
    %345 = vmatprep.subr.mxu0 0.0
    %346 = vmatpush1.msra.mxu0 0.0
    %347 = vmatprep.subr.mxu0 0.0
    %348 = vmatpush1.msra.mxu0 0.0
    %349 = vmatprep.subr.mxu0 0.0
    %350 = vmatpush1.msra.mxu0 0.0
    %351 = vmatprep.subr.mxu0 0.0
    %352 = vmatpush1.msra.mxu0 0.0
    %353 = vmatprep.subr.mxu0 0.0
    %354 = vmatpush1.msra.mxu0 0.0
    %355 = vmatprep.subr.mxu0 0.0
    %356 = vmatpush1.msra.mxu0 0.0
    %357 = vmatprep.subr.mxu0 0.0
    %358 = vmatpush1.msra.mxu0 0.0
    %359 = vmatprep.subr.mxu0 0.0
    %360 = vmatpush1.msra.mxu0 0.0
    %361 = vmatprep.subr.mxu0 0.0
    %362 = vmatpush1.msra.mxu0 0.0
    %363 = vmatprep.subr.mxu0 0.0
    %364 = vmatpush1.msra.mxu0 0.0
    %365 = vmatprep.subr.mxu0 0.0
    %366 = vmatpush1.msra.mxu0 0.0
    %367 = vmatprep.mubr.f32.mxu0 0.0
    %368 = vmatmul.mubr.f32.gmra.mrb[0].mxu0 %v279
    %v369 = vpop.f32.mrb[0].mxu0
    %v370 = vadd.f32 %v301, %v369
    %v371 = vpop.f32.mrb[0].mxu0
    %372 = vdwg.mxu0
    %vm373 = vcmp.gt.f32.partialorder %v370, 0.0
    %v374 = vmul.f32 %v370, 0.2
    %v375 = vsel %vm373, %v370, %v374
    %v376 = vld [vmem:[#allocation7] sm:$0xff]
    %v377 = vld [vmem:[#allocation7 + $0x8] sm:$0xff]
    %v378 = vld [vmem:[#allocation7 + $0x10] sm:$0xff]
    %v379 = vld [vmem:[#allocation7 + $0x18] sm:$0xff]
    %v380 = vld [vmem:[#allocation7 + $0x20] sm:$0xff]
    %v381 = vld [vmem:[#allocation7 + $0x28] sm:$0xff]
    %v382 = vld [vmem:[#allocation7 + $0x30] sm:$0xff]
    %v383 = vld [vmem:[#allocation7 + $0x38] sm:$0xff]
    %v384 = vld [vmem:[#allocation7 + $0x40] sm:$0xff]
    %v385 = vld [vmem:[#allocation7 + $0x48] sm:$0xff]
    %v386 = vld [vmem:[#allocation7 + $0x50] sm:$0xff]
    %v387 = vld [vmem:[#allocation7 + $0x58] sm:$0xff]
    %v388 = vld [vmem:[#allocation7 + $0x60] sm:$0xff]
    %v389 = vld [vmem:[#allocation7 + $0x68] sm:$0xff]
    %v390 = vld [vmem:[#allocation7 + $0x70] sm:$0xff]
    %v391 = vld [vmem:[#allocation7 + $0x78] sm:$0xff]
    %v392 = vld [vmem:[#allocation7 + $0x80] sm:$0xff]
    %v393 = vld [vmem:[#allocation7 + $0x88] sm:$0xff]
    %v394 = vld [vmem:[#allocation7 + $0x90] sm:$0xff]
    %v395 = vld [vmem:[#allocation7 + $0x98] sm:$0xff]
    %v396 = vld [vmem:[#allocation7 + $0xa0] sm:$0xff]
    %v397 = vld [vmem:[#allocation7 + $0xa8] sm:$0xff]
    %v398 = vld [vmem:[#allocation7 + $0xb0] sm:$0xff]
    %v399 = vld [vmem:[#allocation7 + $0xb8] sm:$0xff]
    %v400 = vld [vmem:[#allocation7 + $0xc0] sm:$0xff]
    %v401 = vld [vmem:[#allocation7 + $0xc8] sm:$0xff]
    %v402 = vld [vmem:[#allocation7 + $0xd0] sm:$0xff]
    %v403 = vld [vmem:[#allocation7 + $0xd8] sm:$0xff]
    %v404 = vld [vmem:[#allocation7 + $0xe0] sm:$0xff]
    %v405 = vld [vmem:[#allocation7 + $0xe8] sm:$0xff]
    %v406 = vld [vmem:[#allocation7 + $0xf0] sm:$0xff]
    %v407 = vld [vmem:[#allocation7 + $0xf8] sm:$0xff]
    %v408 = vld [vmem:[#allocation7 + $0x100] sm:$0xff]
    %v409 = vld [vmem:[#allocation7 + $0x108] sm:$0xff]
    %v410 = vld [vmem:[#allocation7 + $0x110] sm:$0xff]
    %v411 = vld [vmem:[#allocation7 + $0x118] sm:$0xff]
    %v412 = vld [vmem:[#allocation7 + $0x120] sm:$0xff]
    %v413 = vld [vmem:[#allocation7 + $0x128] sm:$0xff]
    %v414 = vld [vmem:[#allocation7 + $0x130] sm:$0xff]
    %v415 = vld [vmem:[#allocation7 + $0x138] sm:$0xff]
    %v416 = vld [vmem:[#allocation7 + $0x140] sm:$0xff]
    %v417 = vld [vmem:[#allocation7 + $0x148] sm:$0xff]
    %v418 = vld [vmem:[#allocation7 + $0x150] sm:$0xff]
    %v419 = vld [vmem:[#allocation7 + $0x158] sm:$0xff]
    %v420 = vld [vmem:[#allocation7 + $0x160] sm:$0xff]
    %v421 = vld [vmem:[#allocation7 + $0x168] sm:$0xff]
    %v422 = vld [vmem:[#allocation7 + $0x170] sm:$0xff]
    %v423 = vld [vmem:[#allocation7 + $0x178] sm:$0xff]
    %v424 = vld [vmem:[#allocation7 + $0x180] sm:$0xff]
    %v425 = vld [vmem:[#allocation7 + $0x188] sm:$0xff]
    %v426 = vld [vmem:[#allocation7 + $0x190] sm:$0xff]
    %v427 = vld [vmem:[#allocation7 + $0x198] sm:$0xff]
    %v428 = vld [vmem:[#allocation7 + $0x1a0] sm:$0xff]
    %v429 = vld [vmem:[#allocation7 + $0x1a8] sm:$0xff]
    %v430 = vld [vmem:[#allocation7 + $0x1b0] sm:$0xff]
    %v431 = vld [vmem:[#allocation7 + $0x1b8] sm:$0xff]
    %v432 = vld [vmem:[#allocation7 + $0x1c0] sm:$0xff]
    %v433 = vld [vmem:[#allocation7 + $0x1c8] sm:$0xff]
    %v434 = vld [vmem:[#allocation7 + $0x1d0] sm:$0xff]
    %v435 = vld [vmem:[#allocation7 + $0x1d8] sm:$0xff]
    %v436 = vld [vmem:[#allocation7 + $0x1e0] sm:$0xff]
    %v437 = vld [vmem:[#allocation7 + $0x1e8] sm:$0xff]
    %v438 = vld [vmem:[#allocation7 + $0x1f0] sm:$0xff]
    %v439 = vld [vmem:[#allocation7 + $0x1f8] sm:$0xff]
    %v440 = vld [vmem:[#allocation7 + $0x200] sm:$0xff]
    %v441 = vld [vmem:[#allocation7 + $0x208] sm:$0xff]
    %v442 = vld [vmem:[#allocation7 + $0x210] sm:$0xff]
    %v443 = vld [vmem:[#allocation7 + $0x218] sm:$0xff]
    %v444 = vld [vmem:[#allocation7 + $0x220] sm:$0xff]
    %v445 = vld [vmem:[#allocation7 + $0x228] sm:$0xff]
    %v446 = vld [vmem:[#allocation7 + $0x230] sm:$0xff]
    %v447 = vld [vmem:[#allocation7 + $0x238] sm:$0xff]
    %v448 = vld [vmem:[#allocation7 + $0x240] sm:$0xff]
    %v449 = vld [vmem:[#allocation7 + $0x248] sm:$0xff]
    %v450 = vld [vmem:[#allocation7 + $0x250] sm:$0xff]
    %v451 = vld [vmem:[#allocation7 + $0x258] sm:$0xff]
    %v452 = vld [vmem:[#allocation7 + $0x260] sm:$0xff]
    %v453 = vld [vmem:[#allocation7 + $0x268] sm:$0xff]
    %v454 = vld [vmem:[#allocation7 + $0x270] sm:$0xff]
    %v455 = vld [vmem:[#allocation7 + $0x278] sm:$0xff]
    %v456 = vld [vmem:[#allocation7 + $0x280] sm:$0xff]
    %v457 = vld [vmem:[#allocation7 + $0x288] sm:$0xff]
    %v458 = vld [vmem:[#allocation7 + $0x290] sm:$0xff]
    %v459 = vld [vmem:[#allocation7 + $0x298] sm:$0xff]
    %v460 = vld [vmem:[#allocation7 + $0x2a0] sm:$0xff]
    %v461 = vld [vmem:[#allocation7 + $0x2a8] sm:$0xff]
    %v462 = vld [vmem:[#allocation7 + $0x2b0] sm:$0xff]
    %v463 = vld [vmem:[#allocation7 + $0x2b8] sm:$0xff]
    %v464 = vld [vmem:[#allocation7 + $0x2c0] sm:$0xff]
    %v465 = vld [vmem:[#allocation7 + $0x2c8] sm:$0xff]
    %v466 = vld [vmem:[#allocation7 + $0x2d0] sm:$0xff]
    %v467 = vld [vmem:[#allocation7 + $0x2d8] sm:$0xff]
    %v468 = vld [vmem:[#allocation7 + $0x2e0] sm:$0xff]
    %v469 = vld [vmem:[#allocation7 + $0x2e8] sm:$0xff]
    %v470 = vld [vmem:[#allocation7 + $0x2f0] sm:$0xff]
    %v471 = vld [vmem:[#allocation7 + $0x2f8] sm:$0xff]
    %v472 = vld [vmem:[#allocation7 + $0x300] sm:$0xff]
    %v473 = vld [vmem:[#allocation7 + $0x308] sm:$0xff]
    %v474 = vld [vmem:[#allocation7 + $0x310] sm:$0xff]
    %v475 = vld [vmem:[#allocation7 + $0x318] sm:$0xff]
    %v476 = vld [vmem:[#allocation7 + $0x320] sm:$0xff]
    %v477 = vld [vmem:[#allocation7 + $0x328] sm:$0xff]
    %v478 = vld [vmem:[#allocation7 + $0x330] sm:$0xff]
    %v479 = vld [vmem:[#allocation7 + $0x338] sm:$0xff]
    %v480 = vld [vmem:[#allocation7 + $0x340] sm:$0xff]
    %v481 = vld [vmem:[#allocation7 + $0x348] sm:$0xff]
    %v482 = vld [vmem:[#allocation7 + $0x350] sm:$0xff]
    %v483 = vld [vmem:[#allocation7 + $0x358] sm:$0xff]
    %v484 = vld [vmem:[#allocation7 + $0x360] sm:$0xff]
    %v485 = vld [vmem:[#allocation7 + $0x368] sm:$0xff]
    %v486 = vld [vmem:[#allocation7 + $0x370] sm:$0xff]
    %v487 = vld [vmem:[#allocation7 + $0x378] sm:$0xff]
    %v488 = vld [vmem:[%s8] sm:$0xff]
    %v490 = vlaneseq
    %v491 = vshrl.u32 %v490, 7
    %v492 = vsub.s32 0, %v491
    %v493 = vrot.slane %v488, %v492
    %v494 = vlaneseq
    %v495 = vshrl.u32 %v494, 7
    %v496 = vsub.s32 1, %v495
    %v497 = vrot.slane %v488, %v496
    %v498 = vlaneseq
    %v499 = vshrl.u32 %v498, 7
    %v500 = vsub.s32 2, %v499
    %v501 = vrot.slane %v488, %v500
    %v502 = vlaneseq
    %v503 = vshrl.u32 %v502, 7
    %v504 = vsub.s32 3, %v503
    %v505 = vrot.slane %v488, %v504
    %v506 = vlaneseq
    %v507 = vshrl.u32 %v506, 7
    %v508 = vsub.s32 4, %v507
    %v509 = vrot.slane %v488, %v508
    %v510 = vlaneseq
    %v511 = vshrl.u32 %v510, 7
    %v512 = vsub.s32 5, %v511
    %v513 = vrot.slane %v488, %v512
    %v514 = vlaneseq
    %v515 = vshrl.u32 %v514, 7
    %v516 = vsub.s32 6, %v515
    %v517 = vrot.slane %v488, %v516
    %525 = vmatprep.subr.mxu0 %v377
    %526 = vmatpush1.msra.mxu0 %v376
    %527 = vmatprep.subr.mxu0 %v384
    %528 = vmatpush1.msra.mxu0 %v383
    %529 = vmatprep.subr.mxu0 %v391
    %530 = vmatpush1.msra.mxu0 %v390
    %531 = vmatprep.subr.mxu0 %v398
    %532 = vmatpush1.msra.mxu0 %v397
    %533 = vmatprep.subr.mxu0 %v405
    %534 = vmatpush1.msra.mxu0 %v404
    %535 = vmatprep.subr.mxu0 %v412
    %536 = vmatpush1.msra.mxu0 %v411
    %537 = vmatprep.subr.mxu0 %v419
    %538 = vmatpush1.msra.mxu0 %v418
    %539 = vmatprep.subr.mxu0 %v426
    %540 = vmatpush1.msra.mxu0 %v425
    %541 = vmatprep.subr.mxu0 %v433
    %542 = vmatpush1.msra.mxu0 %v432
    %543 = vmatprep.subr.mxu0 %v440
    %544 = vmatpush1.msra.mxu0 %v439
    %545 = vmatprep.subr.mxu0 %v447
    %546 = vmatpush1.msra.mxu0 %v446
    %547 = vmatprep.subr.mxu0 %v454
    %548 = vmatpush1.msra.mxu0 %v453
    %549 = vmatprep.subr.mxu0 %v461
    %550 = vmatpush1.msra.mxu0 %v460
    %551 = vmatprep.subr.mxu0 %v468
    %552 = vmatpush1.msra.mxu0 %v467
    %553 = vmatprep.subr.mxu0 %v475
    %554 = vmatpush1.msra.mxu0 %v474
    %555 = vmatprep.subr.mxu0 %v482
    %556 = vmatpush1.msra.mxu0 %v481
    %557 = vmatprep.subr.mxu0 0.0
    %558 = vmatpush1.msra.mxu0 0.0
    %559 = vmatprep.subr.mxu0 0.0
    %560 = vmatpush1.msra.mxu0 0.0
    %561 = vmatprep.subr.mxu0 0.0
    %562 = vmatpush1.msra.mxu0 0.0
    %563 = vmatprep.subr.mxu0 0.0
    %564 = vmatpush1.msra.mxu0 0.0
    %565 = vmatprep.subr.mxu0 0.0
    %566 = vmatpush1.msra.mxu0 0.0
    %567 = vmatprep.subr.mxu0 0.0
    %568 = vmatpush1.msra.mxu0 0.0
    %569 = vmatprep.subr.mxu0 0.0
    %570 = vmatpush1.msra.mxu0 0.0
    %571 = vmatprep.subr.mxu0 0.0
    %572 = vmatpush1.msra.mxu0 0.0
    %573 = vmatprep.subr.mxu0 0.0
    %574 = vmatpush1.msra.mxu0 0.0
    %575 = vmatprep.subr.mxu0 0.0
    %576 = vmatpush1.msra.mxu0 0.0
    %577 = vmatprep.subr.mxu0 0.0
    %578 = vmatpush1.msra.mxu0 0.0
    %579 = vmatprep.subr.mxu0 0.0
    %580 = vmatpush1.msra.mxu0 0.0
    %581 = vmatprep.subr.mxu0 0.0
    %582 = vmatpush1.msra.mxu0 0.0
    %583 = vmatprep.subr.mxu0 0.0
    %584 = vmatpush1.msra.mxu0 0.0
    %585 = vmatprep.subr.mxu0 0.0
    %586 = vmatpush1.msra.mxu0 0.0
    %587 = vmatprep.subr.mxu0 0.0
    %588 = vmatpush1.msra.mxu0 0.0
    %589 = vmatprep.mubr.f32.mxu0 0.0
    %590 = vmatmul.mubr.f32.gmra.mrb[0].mxu0 %v375
    %v591 = vpop.f32.mrb[0].mxu0
    %v592 = vadd.f32 %v493, %v591
    %v593 = vpop.f32.mrb[0].mxu0
    %v594 = vadd.f32 %v497, %v593
    %595 = vdwg.mxu0
    %596 = vmatprep.subr.mxu0 %v379
    %597 = vmatpush1.msra.mxu0 %v378
    %598 = vmatprep.subr.mxu0 %v386
    %599 = vmatpush1.msra.mxu0 %v385
    %600 = vmatprep.subr.mxu0 %v393
    %601 = vmatpush1.msra.mxu0 %v392
    %602 = vmatprep.subr.mxu0 %v400
    %603 = vmatpush1.msra.mxu0 %v399
    %604 = vmatprep.subr.mxu0 %v407
    %605 = vmatpush1.msra.mxu0 %v406
    %606 = vmatprep.subr.mxu0 %v414
    %607 = vmatpush1.msra.mxu0 %v413
    %608 = vmatprep.subr.mxu0 %v421
    %609 = vmatpush1.msra.mxu0 %v420
    %610 = vmatprep.subr.mxu0 %v428
    %611 = vmatpush1.msra.mxu0 %v427
    %612 = vmatprep.subr.mxu0 %v435
    %613 = vmatpush1.msra.mxu0 %v434
    %614 = vmatprep.subr.mxu0 %v442
    %615 = vmatpush1.msra.mxu0 %v441
    %616 = vmatprep.subr.mxu0 %v449
    %617 = vmatpush1.msra.mxu0 %v448
    %618 = vmatprep.subr.mxu0 %v456
    %619 = vmatpush1.msra.mxu0 %v455
    %620 = vmatprep.subr.mxu0 %v463
    %621 = vmatpush1.msra.mxu0 %v462
    %622 = vmatprep.subr.mxu0 %v470
    %623 = vmatpush1.msra.mxu0 %v469
    %624 = vmatprep.subr.mxu0 %v477
    %625 = vmatpush1.msra.mxu0 %v476
    %626 = vmatprep.subr.mxu0 %v484
    %627 = vmatpush1.msra.mxu0 %v483
    %628 = vmatprep.subr.mxu0 0.0
    %629 = vmatpush1.msra.mxu0 0.0
    %630 = vmatprep.subr.mxu0 0.0
    %631 = vmatpush1.msra.mxu0 0.0
    %632 = vmatprep.subr.mxu0 0.0
    %633 = vmatpush1.msra.mxu0 0.0
    %634 = vmatprep.subr.mxu0 0.0
    %635 = vmatpush1.msra.mxu0 0.0
    %636 = vmatprep.subr.mxu0 0.0
    %637 = vmatpush1.msra.mxu0 0.0
    %638 = vmatprep.subr.mxu0 0.0
    %639 = vmatpush1.msra.mxu0 0.0
    %640 = vmatprep.subr.mxu0 0.0
    %641 = vmatpush1.msra.mxu0 0.0
    %642 = vmatprep.subr.mxu0 0.0
    %643 = vmatpush1.msra.mxu0 0.0
    %644 = vmatprep.subr.mxu0 0.0
    %645 = vmatpush1.msra.mxu0 0.0
    %646 = vmatprep.subr.mxu0 0.0
    %647 = vmatpush1.msra.mxu0 0.0
    %648 = vmatprep.subr.mxu0 0.0
    %649 = vmatpush1.msra.mxu0 0.0
    %650 = vmatprep.subr.mxu0 0.0
    %651 = vmatpush1.msra.mxu0 0.0
    %652 = vmatprep.subr.mxu0 0.0
    %653 = vmatpush1.msra.mxu0 0.0
    %654 = vmatprep.subr.mxu0 0.0
    %655 = vmatpush1.msra.mxu0 0.0
    %656 = vmatprep.subr.mxu0 0.0
    %657 = vmatpush1.msra.mxu0 0.0
    %658 = vmatprep.subr.mxu0 0.0
    %659 = vmatpush1.msra.mxu0 0.0
    %660 = vmatprep.mubr.f32.mxu0 0.0
    %661 = vmatmul.mubr.f32.gmra.mrb[0].mxu0 %v375
    %v662 = vpop.f32.mrb[0].mxu0
    %v663 = vadd.f32 %v501, %v662
    %v664 = vpop.f32.mrb[0].mxu0
    %v665 = vadd.f32 %v505, %v664
    %666 = vdwg.mxu0
    %667 = vmatprep.subr.mxu0 %v381
    %668 = vmatpush1.msra.mxu0 %v380
    %669 = vmatprep.subr.mxu0 %v388
    %670 = vmatpush1.msra.mxu0 %v387
    %671 = vmatprep.subr.mxu0 %v395
    %672 = vmatpush1.msra.mxu0 %v394
    %673 = vmatprep.subr.mxu0 %v402
    %674 = vmatpush1.msra.mxu0 %v401
    %675 = vmatprep.subr.mxu0 %v409
    %676 = vmatpush1.msra.mxu0 %v408
    %677 = vmatprep.subr.mxu0 %v416
    %678 = vmatpush1.msra.mxu0 %v415
    %679 = vmatprep.subr.mxu0 %v423
    %680 = vmatpush1.msra.mxu0 %v422
    %681 = vmatprep.subr.mxu0 %v430
    %682 = vmatpush1.msra.mxu0 %v429
    %683 = vmatprep.subr.mxu0 %v437
    %684 = vmatpush1.msra.mxu0 %v436
    %685 = vmatprep.subr.mxu0 %v444
    %686 = vmatpush1.msra.mxu0 %v443
    %687 = vmatprep.subr.mxu0 %v451
    %688 = vmatpush1.msra.mxu0 %v450
    %689 = vmatprep.subr.mxu0 %v458
    %690 = vmatpush1.msra.mxu0 %v457
    %691 = vmatprep.subr.mxu0 %v465
    %692 = vmatpush1.msra.mxu0 %v464
    %693 = vmatprep.subr.mxu0 %v472
    %694 = vmatpush1.msra.mxu0 %v471
    %695 = vmatprep.subr.mxu0 %v479
    %696 = vmatpush1.msra.mxu0 %v478
    %697 = vmatprep.subr.mxu0 %v486
    %698 = vmatpush1.msra.mxu0 %v485
    %699 = vmatprep.subr.mxu0 0.0
    %700 = vmatpush1.msra.mxu0 0.0
    %701 = vmatprep.subr.mxu0 0.0
    %702 = vmatpush1.msra.mxu0 0.0
    %703 = vmatprep.subr.mxu0 0.0
    %704 = vmatpush1.msra.mxu0 0.0
    %705 = vmatprep.subr.mxu0 0.0
    %706 = vmatpush1.msra.mxu0 0.0
    %707 = vmatprep.subr.mxu0 0.0
    %708 = vmatpush1.msra.mxu0 0.0
    %709 = vmatprep.subr.mxu0 0.0
    %710 = vmatpush1.msra.mxu0 0.0
    %711 = vmatprep.subr.mxu0 0.0
    %712 = vmatpush1.msra.mxu0 0.0
    %713 = vmatprep.subr.mxu0 0.0
    %714 = vmatpush1.msra.mxu0 0.0
    %715 = vmatprep.subr.mxu0 0.0
    %716 = vmatpush1.msra.mxu0 0.0
    %717 = vmatprep.subr.mxu0 0.0
    %718 = vmatpush1.msra.mxu0 0.0
    %719 = vmatprep.subr.mxu0 0.0
    %720 = vmatpush1.msra.mxu0 0.0
    %721 = vmatprep.subr.mxu0 0.0
    %722 = vmatpush1.msra.mxu0 0.0
    %723 = vmatprep.subr.mxu0 0.0
    %724 = vmatpush1.msra.mxu0 0.0
    %725 = vmatprep.subr.mxu0 0.0
    %726 = vmatpush1.msra.mxu0 0.0
    %727 = vmatprep.subr.mxu0 0.0
    %728 = vmatpush1.msra.mxu0 0.0
    %729 = vmatprep.subr.mxu0 0.0
    %730 = vmatpush1.msra.mxu0 0.0
    %731 = vmatprep.mubr.f32.mxu0 0.0
    %732 = vmatmul.mubr.f32.gmra.mrb[0].mxu0 %v375
    %v733 = vpop.f32.mrb[0].mxu0
    %v734 = vadd.f32 %v509, %v733
    %v735 = vpop.f32.mrb[0].mxu0
    %v736 = vadd.f32 %v513, %v735
    %737 = vdwg.mxu0
    %738 = vmatprep.subr.mxu0 0.0
    %739 = vmatpush1.msra.mxu0 %v382
    %740 = vmatprep.subr.mxu0 0.0
    %741 = vmatpush1.msra.mxu0 %v389
    %742 = vmatprep.subr.mxu0 0.0
    %743 = vmatpush1.msra.mxu0 %v396
    %744 = vmatprep.subr.mxu0 0.0
    %745 = vmatpush1.msra.mxu0 %v403
    %746 = vmatprep.subr.mxu0 0.0
    %747 = vmatpush1.msra.mxu0 %v410
    %748 = vmatprep.subr.mxu0 0.0
    %749 = vmatpush1.msra.mxu0 %v417
    %750 = vmatprep.subr.mxu0 0.0
    %751 = vmatpush1.msra.mxu0 %v424
    %752 = vmatprep.subr.mxu0 0.0
    %753 = vmatpush1.msra.mxu0 %v431
    %754 = vmatprep.subr.mxu0 0.0
    %755 = vmatpush1.msra.mxu0 %v438
    %756 = vmatprep.subr.mxu0 0.0
    %757 = vmatpush1.msra.mxu0 %v445
    %758 = vmatprep.subr.mxu0 0.0
    %759 = vmatpush1.msra.mxu0 %v452
    %760 = vmatprep.subr.mxu0 0.0
    %761 = vmatpush1.msra.mxu0 %v459
    %762 = vmatprep.subr.mxu0 0.0
    %763 = vmatpush1.msra.mxu0 %v466
    %764 = vmatprep.subr.mxu0 0.0
    %765 = vmatpush1.msra.mxu0 %v473
    %766 = vmatprep.subr.mxu0 0.0
    %767 = vmatpush1.msra.mxu0 %v480
    %768 = vmatprep.subr.mxu0 0.0
    %769 = vmatpush1.msra.mxu0 %v487
    %770 = vmatprep.subr.mxu0 0.0
    %771 = vmatpush1.msra.mxu0 0.0
    %772 = vmatprep.subr.mxu0 0.0
    %773 = vmatpush1.msra.mxu0 0.0
    %774 = vmatprep.subr.mxu0 0.0
    %775 = vmatpush1.msra.mxu0 0.0
    %776 = vmatprep.subr.mxu0 0.0
    %777 = vmatpush1.msra.mxu0 0.0
    %778 = vmatprep.subr.mxu0 0.0
    %779 = vmatpush1.msra.mxu0 0.0
    %780 = vmatprep.subr.mxu0 0.0
    %781 = vmatpush1.msra.mxu0 0.0
    %782 = vmatprep.subr.mxu0 0.0
    %783 = vmatpush1.msra.mxu0 0.0
    %784 = vmatprep.subr.mxu0 0.0
    %785 = vmatpush1.msra.mxu0 0.0
    %786 = vmatprep.subr.mxu0 0.0
    %787 = vmatpush1.msra.mxu0 0.0
    %788 = vmatprep.subr.mxu0 0.0
    %789 = vmatpush1.msra.mxu0 0.0
    %790 = vmatprep.subr.mxu0 0.0
    %791 = vmatpush1.msra.mxu0 0.0
    %792 = vmatprep.subr.mxu0 0.0
    %793 = vmatpush1.msra.mxu0 0.0
    %794 = vmatprep.subr.mxu0 0.0
    %795 = vmatpush1.msra.mxu0 0.0
    %796 = vmatprep.subr.mxu0 0.0
    %797 = vmatpush1.msra.mxu0 0.0
    %798 = vmatprep.subr.mxu0 0.0
    %799 = vmatpush1.msra.mxu0 0.0
    %800 = vmatprep.subr.mxu0 0.0
    %801 = vmatpush1.msra.mxu0 0.0
    %802 = vmatprep.mubr.f32.mxu0 0.0
    %803 = vmatmul.mubr.f32.gmra.mrb[0].mxu0 %v375
    %v804 = vpop.f32.mrb[0].mxu0
    %v805 = vadd.f32 %v517, %v804
    %v806 = vpop.f32.mrb[0].mxu0
    %807 = vdwg.mxu0
    %v808 = vtanh.pop %v592
    %v809 = vtanh.pop %v594
    %v810 = vtanh.pop %v663
    %v811 = vtanh.pop %v665
    %v812 = vtanh.pop %v734
    %v813 = vtanh.pop %v736
    %v814 = vtanh.pop %v805
    %815 = vst [vmem:[%s9] sm:$0xff] %v808
    %816 = vst [vmem:[%s9 + $0x8] sm:$0xff] %v809
    %817 = vst [vmem:[%s9 + $0x10] sm:$0xff] %v810
    %818 = vst [vmem:[%s9 + $0x18] sm:$0xff] %v811
    %819 = vst [vmem:[%s9 + $0x20] sm:$0xff] %v812
    %820 = vst [vmem:[%s9 + $0x28] sm:$0xff] %v813
    %821 = vst [vmem:[%s9 + $0x30] sm:$0xff] %v814
    // Predicated region
    $region54: #{generator_forward.1} parent=1 // pred_check
      _
    $region55: #{generator_forward.1} parent=1 // pred_check_branch
      %823 = sbr.rel (0) target = $region57
    $region56: #{generator_forward.1} parent=1 // pred_region
      _
    $region57: #{generator_forward.1} parent=1 // pred_fallthru
      _
    // Predicated region
    $region58: #{generator_forward.1} parent=1 // pred_check
      _
    $region59: #{generator_forward.1} parent=1 // pred_check_branch
      %825 = sbr.rel (0) target = $region61
    $region60: #{generator_forward.1} parent=1 // pred_region
      _
    $region61: #{generator_forward.1} parent=1 // pred_fallthru
      _
    %826 = vsyncpa [#allocation3], 1
    %827 = vsyncpa [#allocation5], 1
    %828 = vsyncpa [#allocation8], 1

</llo_original>
